<compile_context>
chip_gen: v7x
topology: tpu7x:2x2x1
jax: 0.10.0
libtpu: 0.0.40
codegen_flags: <defaults>
</compile_context>

<pallas_src>
import functools

import jax
import jax.numpy as jnp
from jax.experimental import pallas as pl
from jax.experimental.pallas import tpu as pltpu


def _round_up(x, m):
    return ((x + m - 1) // m) * m


# ----------------------------------------------------------------------------
# Fused two-layer GCN kernel
# ----------------------------------------------------------------------------
def fused_gcn2_kernel(adj_ref, x_ref, w1_ref, b1_ref, shift1_ref,
                      w2_ref, b2_ref, shift2_ref,
                      o_ref, s1_ref, s2_ref, *, tm):
    """grid = (2 phases, num_row_tiles); weights already have BN scale folded."""
    phase = pl.program_id(0)
    i = pl.program_id(1)

    # --- once: S1 = x @ W1' + b1'   (layer-1 Linear, all nodes) -------------
    @pl.when((phase == 0) & (i == 0))
    def _():
        s1 = jnp.dot(x_ref[...], w1_ref[...],
                     preferred_element_type=jnp.float32) + b1_ref[...]
        s1_ref[...] = s1.astype(s1_ref.dtype)

    # --- phase 0: hidden layer for row tile i, stash S2_i for phase 1 -------
    @pl.when(phase == 0)
    def _():
        agg = jnp.dot(adj_ref[...], s1_ref[...],
                      preferred_element_type=jnp.float32) + shift1_ref[...]
        h = jnp.maximum(agg, 0.0).astype(jnp.bfloat16)      # ReLU in f32, cast for MXU
        s2 = jnp.dot(h, w2_ref[...],
                     preferred_element_type=jnp.float32) + b2_ref[...]
        row = pl.multiple_of(i * tm, tm)
        s2_ref[pl.ds(row, tm), :] = s2.astype(s2_ref.dtype)
        # hygiene: never DMA uninitialized VMEM to HBM (phase 1 overwrites it)
        o_ref[...] = jnp.zeros_like(o_ref)

    # --- phase 1: output layer for row tile i --------------------------------
    @pl.when(phase == 1)
    def _():
        out = jnp.dot(adj_ref[...], s2_ref[...],
                      preferred_element_type=jnp.float32) + shift2_ref[...]
        o_ref[...] = out.astype(o_ref.dtype)


# ----------------------------------------------------------------------------
# Parameter construction (deterministic, mirrors module __init__)
# ----------------------------------------------------------------------------
def xavier_uniform(key, shape):
    fan_out, fan_in = shape                     # PyTorch Linear weight (out, in)
    bound = jnp.sqrt(6.0 / (fan_in + fan_out))
    return jax.random.uniform(key, shape, jnp.float32, -bound, bound)


def make_gcn_layer_params(key, in_features, out_features):
    w = xavier_uniform(key, (out_features, in_features))   # nn.Linear weight
    b = jnp.zeros((out_features,), jnp.float32)             # zero-init bias
    # BatchNorm1d defaults: gamma=1, beta=0, running_mean=0, running_var=1
    gamma = jnp.ones((out_features,), jnp.float32)
    beta = jnp.zeros((out_features,), jnp.float32)
    r_mean = jnp.zeros((out_features,), jnp.float32)
    r_var = jnp.ones((out_features,), jnp.float32)
    eps = 1e-5
    scale = gamma / jnp.sqrt(r_var + eps)
    shift = beta - r_mean * scale
    return {"w": w, "b": b, "scale": scale, "shift": shift}


def _fold_and_pad_layer(layer, in_pad, out_pad):
    """Fold BN scale into Linear weight/bias; zero-pad to lane-dense shapes."""
    w_t = layer["w"].T * layer["scale"][None, :]            # (in, out)
    b = layer["b"] * layer["scale"]
    shift = layer["shift"]
    fi, fo = w_t.shape
    w_p = jnp.zeros((in_pad, out_pad), jnp.float32).at[:fi, :fo].set(w_t)
    b_p = jnp.zeros((1, out_pad), jnp.float32).at[0, :fo].set(b)
    s_p = jnp.zeros((1, out_pad), jnp.float32).at[0, :fo].set(shift)
    return w_p.astype(jnp.bfloat16), b_p, s_p


# ----------------------------------------------------------------------------
# Fs_encoder forward (eval mode)
# ----------------------------------------------------------------------------
def fs_encoder_forward(x, adj, params, *, tm=128):
    assert len(params["layers"]) == 1, "fused kernel implements n_layers=2"

    n, nfeat = x.shape
    nhid = params["layers"][0]["w"].shape[0]
    nclass = params["output_layer"]["w"].shape[0]

    tm = min(tm, _round_up(n, 8))
    n_pad = _round_up(n, tm)
    f0 = _round_up(nfeat, 128)        # lane-dense (128-multiple) feature dims
    f1 = _round_up(nhid, 128)
    f2 = _round_up(nclass, 128)

    # bf16 MXU operands (accumulation stays f32 inside the kernel)
    x_p = jnp.zeros((n_pad, f0), jnp.float32).at[:n, :nfeat].set(x)
    x_p = x_p.astype(jnp.bfloat16)
    adj_p = jnp.zeros((n_pad, n_pad), jnp.float32).at[:n, :n].set(adj)
    adj_p = adj_p.astype(jnp.bfloat16)

    w1, b1, shift1 = _fold_and_pad_layer(params["layers"][0], f0, f1)
    w2, b2, shift2 = _fold_and_pad_layer(params["output_layer"], f1, f2)

    nt = n_pad // tm

    flops = 2 * n_pad * (f0 * f1 + n_pad * f1 + f1 * f2 + n_pad * f2)
    bytes_accessed = (2 * n_pad * n_pad * 2 + n_pad * f0 * 2
                      + f0 * f1 * 2 + f1 * f2 * 2 + n_pad * f2 * 4)

    vmem_need = (2 * tm * n_pad * 2            # adj row tile, double-buffered
                 + 2 * n_pad * f0 * 2          # x (VMEM resident)
                 + 2 * (f0 * f1 + f1 * f2) * 2 # weights
                 + n_pad * (f1 + f2) * 2       # S1 / S2 scratch
                 + 2 * tm * f2 * 4             # output tile
                 + (1 << 20))
    # NOTE: cap below 96 MiB (v6e physical 128 MiB); v7x physical is 64 MiB/TC
    # so at demo sizes this resolves to the 32 MiB floor.
    vmem_limit = int(min(max(2 * vmem_need, 32 * 1024 * 1024),
                         96 * 1024 * 1024))

    out = pl.pallas_call(
        functools.partial(fused_gcn2_kernel, tm=tm),
        out_shape=jax.ShapeDtypeStruct((n_pad, f2), jnp.float32),
        grid_spec=pltpu.PrefetchScalarGridSpec(
            num_scalar_prefetch=0,
            grid=(2, nt),                                     # (phase, row tile)
            in_specs=[
                pl.BlockSpec((tm, n_pad), lambda p, i: (i, 0)),   # adj row tile
                pl.BlockSpec((n_pad, f0), lambda p, i: (0, 0)),   # x (resident)
                pl.BlockSpec((f0, f1), lambda p, i: (0, 0)),      # W1'
                pl.BlockSpec((1, f1), lambda p, i: (0, 0)),       # b1'
                pl.BlockSpec((1, f1), lambda p, i: (0, 0)),       # shift1
                pl.BlockSpec((f1, f2), lambda p, i: (0, 0)),      # W2'
                pl.BlockSpec((1, f2), lambda p, i: (0, 0)),       # b2'
                pl.BlockSpec((1, f2), lambda p, i: (0, 0)),       # shift2
            ],
            out_specs=pl.BlockSpec((tm, f2), lambda p, i: (i, 0)),
            scratch_shapes=[pltpu.VMEM((n_pad, f1), jnp.bfloat16),   # S1
                            pltpu.VMEM((n_pad, f2), jnp.bfloat16)],  # S2
        ),
        compiler_params=pltpu.CompilerParams(
            # Row tiles share the S1/S2 VMEM scratch across both phases, so the
            # grid must stay sequential ("arbitrary"); it cannot be sharded
            # across v7x's two TensorCores without a cross-core exchange.
            dimension_semantics=("arbitrary", "arbitrary"),
            vmem_limit_bytes=vmem_limit),
        cost_estimate=pl.CostEstimate(flops=flops, transcendentals=0,
                                      bytes_accessed=bytes_accessed),
    )(adj_p, x_p, w1, b1, shift1, w2, b2, shift2)

    return out[:n, :nclass]


# ----------------------------------------------------------------------------
# References
# ----------------------------------------------------------------------------
def reference_forward_f32(x, adj, params):
    """Exact eval-mode module math in f32."""
    h = x
    for lp in params["layers"]:
        s = h @ lp["w"].T + lp["b"]
        h = jnp.maximum((adj @ s) * lp["scale"] + lp["shift"], 0.0)
    op = params["output_layer"]
    s = h @ op["w"].T + op["b"]
    return (adj @ s) * op["scale"] + op["shift"]


def reference_forward_bf16(x, adj, params):
    """Mirrors the kernel's folded / bf16 math for a tight numerical check."""
    bf = jnp.bfloat16
    adj_b = adj.astype(bf)
    lp = params["layers"][0]
    w1 = (lp["w"].T * lp["scale"][None, :]).astype(bf)
    b1 = lp["b"] * lp["scale"]
    s1 = (jnp.dot(x.astype(bf), w1, preferred_element_type=jnp.float32)
          + b1).astype(bf)
    h = jnp.maximum(jnp.dot(adj_b, s1, preferred_element_type=jnp.float32)
                    + lp["shift"], 0.0).astype(bf)
    op = params["output_layer"]
    w2 = (op["w"].T * op["scale"][None, :]).astype(bf)
    b2 = op["b"] * op["scale"]
    s2 = (jnp.dot(h, w2, preferred_element_type=jnp.float32) + b2).astype(bf)
    return jnp.dot(adj_b, s2, preferred_element_type=jnp.float32) + op["shift"]


if __name__ == "__main__":
    # Small shapes consistent with the module: N nodes, nfeat -> nhid -> nclass
    N, NFEAT, NHID, NCLASS = 256, 16, 32, 8      # n_layers=2 (1 hidden + output)

    key = jax.random.PRNGKey(0)
    k_x, k_adj, k_l0, k_out = jax.random.split(key, 4)

    x = jax.random.normal(k_x, (N, NFEAT), jnp.float32)

    # Dense row-normalized adjacency with self loops
    raw = (jax.random.uniform(k_adj, (N, N)) > 0.9).astype(jnp.float32)
    adj = raw + jnp.eye(N, dtype=jnp.float32)
    adj = adj / jnp.sum(adj, axis=1, keepdims=True)

    params = {
        "layers": [make_gcn_layer_params(k_l0, NFEAT, NHID)],
        "output_layer": make_gcn_layer_params(k_out, NHID, NCLASS),
    }

    out = jax.block_until_ready(fs_encoder_forward(x, adj, params))
    assert out.shape == (N, NCLASS), out.shape

    ref_bf16 = reference_forward_bf16(x, adj, params)   # same precision as kernel
    ref_f32 = reference_forward_f32(x, adj, params)     # module semantics, f32

    assert jnp.allclose(out, ref_bf16, atol=2e-3, rtol=2e-3), \
        float(jnp.max(jnp.abs(out - ref_bf16)))
    assert jnp.allclose(out, ref_f32, atol=1e-1, rtol=1e-1), \
        float(jnp.max(jnp.abs(out - ref_f32)))

    print("KERNEL_OK")
</pallas_src>

<mosaic_0001>
module attributes {stable_mosaic.version = 11 : i64} {
  func.func @fused_gcn2_kernel(%arg0: i32, %arg1: i32, %arg2: memref<128x256xbf16, #tpu.memory_space<vmem>>, %arg3: memref<256x128xbf16, #tpu.memory_space<vmem>>, %arg4: memref<128x128xbf16, #tpu.memory_space<vmem>>, %arg5: memref<1x128xf32, #tpu.memory_space<vmem>>, %arg6: memref<1x128xf32, #tpu.memory_space<vmem>>, %arg7: memref<128x128xbf16, #tpu.memory_space<vmem>>, %arg8: memref<1x128xf32, #tpu.memory_space<vmem>>, %arg9: memref<1x128xf32, #tpu.memory_space<vmem>>, %arg10: memref<128x128xf32, #tpu.memory_space<vmem>>, %arg11: memref<256x128xbf16, #tpu.memory_space<vmem>>, %arg12: memref<256x128xbf16, #tpu.memory_space<vmem>>) attributes {dimension_semantics = [#tpu.dimension_semantics<arbitrary>, #tpu.dimension_semantics<arbitrary>], iteration_bounds = array<i64: 2, 2>, scalar_prefetch = 0 : i64, scratch_operands = 2 : i64, tpu.core_type = #tpu.core_type<tc>, window_params = [{transform_indices = @transform_0, window_bounds = array<i64: 128, 256>}, {pipeline_mode = #tpu.pipeline_mode<synchronous>, transform_indices = @transform_1, window_bounds = array<i64: 256, 128>}, {pipeline_mode = #tpu.pipeline_mode<synchronous>, transform_indices = @transform_2, window_bounds = array<i64: 128, 128>}, {pipeline_mode = #tpu.pipeline_mode<synchronous>, transform_indices = @transform_3, window_bounds = array<i64: 1, 128>}, {pipeline_mode = #tpu.pipeline_mode<synchronous>, transform_indices = @transform_4, window_bounds = array<i64: 1, 128>}, {pipeline_mode = #tpu.pipeline_mode<synchronous>, transform_indices = @transform_5, window_bounds = array<i64: 128, 128>}, {pipeline_mode = #tpu.pipeline_mode<synchronous>, transform_indices = @transform_6, window_bounds = array<i64: 1, 128>}, {pipeline_mode = #tpu.pipeline_mode<synchronous>, transform_indices = @transform_7, window_bounds = array<i64: 1, 128>}, {transform_indices = @transform_8, window_bounds = array<i64: 128, 128>}]} {
    %c0_i32 = arith.constant 0 : i32
    %0 = arith.cmpi eq, %arg0, %c0_i32 : i32
    %c0_i32_0 = arith.constant 0 : i32
    %1 = arith.cmpi eq, %arg1, %c0_i32_0 : i32
    %2 = arith.andi %0, %1 : i1
    %3 = arith.extui %2 : i1 to i32
    %c0_i32_1 = arith.constant 0 : i32
    %4 = arith.cmpi ne, %3, %c0_i32_1 : i32
    scf.if %4 {
      %c0 = arith.constant 0 : index
      %c0_5 = arith.constant 0 : index
      %11 = vector.load %arg3[%c0, %c0_5] : memref<256x128xbf16, #tpu.memory_space<vmem>>, vector<256x128xbf16>
      %c0_6 = arith.constant 0 : index
      %c0_7 = arith.constant 0 : index
      %12 = vector.load %arg4[%c0_6, %c0_7] : memref<128x128xbf16, #tpu.memory_space<vmem>>, vector<128x128xbf16>
      %cst = arith.constant dense<0.000000e+00> : vector<256x128xf32>
      %13 = tpu.matmul %11, %12, %cst {dimension_numbers = #tpu.dot_dimension_numbers<[1], [0], [0], [1], [0, 0, 1, 1], [], []>} : vector<256x128xbf16>, vector<128x128xbf16>, vector<256x128xf32> -> vector<256x128xf32>
      %c0_8 = arith.constant 0 : index
      %c0_9 = arith.constant 0 : index
      %14 = vector.load %arg5[%c0_8, %c0_9] : memref<1x128xf32, #tpu.memory_space<vmem>>, vector<1x128xf32>
      %15 = vector.broadcast %14 : vector<1x128xf32> to vector<256x128xf32>
      %16 = arith.addf %13, %15 : vector<256x128xf32>
      %17 = arith.truncf %16 : vector<256x128xf32> to vector<256x128xbf16>
      %c0_10 = arith.constant 0 : index
      %c0_11 = arith.constant 0 : index
      %18 = vector.load %arg11[%c0_10, %c0_11] : memref<256x128xbf16, #tpu.memory_space<vmem>>, vector<256x128xbf16>
      tpu.vector_store %arg11[%c0_10, %c0_11], %17 {strides = array<i32>} : memref<256x128xbf16, #tpu.memory_space<vmem>>, vector<256x128xbf16>,
    } else {
    }
    %c0_i32_2 = arith.constant 0 : i32
    %5 = arith.cmpi eq, %arg0, %c0_i32_2 : i32
    %6 = arith.extui %5 : i1 to i32
    %c0_i32_3 = arith.constant 0 : i32
    %7 = arith.cmpi ne, %6, %c0_i32_3 : i32
    scf.if %7 {
      %c0 = arith.constant 0 : index
      %c0_5 = arith.constant 0 : index
      %11 = vector.load %arg2[%c0, %c0_5] : memref<128x256xbf16, #tpu.memory_space<vmem>>, vector<128x256xbf16>
      %c0_6 = arith.constant 0 : index
      %c0_7 = arith.constant 0 : index
      %12 = vector.load %arg11[%c0_6, %c0_7] : memref<256x128xbf16, #tpu.memory_space<vmem>>, vector<256x128xbf16>
      %cst = arith.constant dense<0.000000e+00> : vector<128x128xf32>
      %13 = tpu.matmul %11, %12, %cst {dimension_numbers = #tpu.dot_dimension_numbers<[1], [0], [0], [1], [0, 0, 1, 1], [], []>} : vector<128x256xbf16>, vector<256x128xbf16>, vector<128x128xf32> -> vector<128x128xf32>
      %c0_8 = arith.constant 0 : index
      %c0_9 = arith.constant 0 : index
      %14 = vector.load %arg6[%c0_8, %c0_9] : memref<1x128xf32, #tpu.memory_space<vmem>>, vector<1x128xf32>
      %15 = vector.broadcast %14 : vector<1x128xf32> to vector<128x128xf32>
      %16 = arith.addf %13, %15 : vector<128x128xf32>
      %cst_10 = arith.constant 0.000000e+00 : f32
      %17 = vector.broadcast %cst_10 : f32 to vector<128x128xf32>
      %18 = arith.maximumf %16, %17 : vector<128x128xf32>
      %19 = arith.truncf %18 : vector<128x128xf32> to vector<128x128xbf16>
      %c0_11 = arith.constant 0 : index
      %c0_12 = arith.constant 0 : index
      %20 = vector.load %arg7[%c0_11, %c0_12] : memref<128x128xbf16, #tpu.memory_space<vmem>>, vector<128x128xbf16>
      %cst_13 = arith.constant dense<0.000000e+00> : vector<128x128xf32>
      %21 = tpu.matmul %19, %20, %cst_13 {dimension_numbers = #tpu.dot_dimension_numbers<[1], [0], [0], [1], [0, 0, 1, 1], [], []>} : vector<128x128xbf16>, vector<128x128xbf16>, vector<128x128xf32> -> vector<128x128xf32>
      %c0_14 = arith.constant 0 : index
      %c0_15 = arith.constant 0 : index
      %22 = vector.load %arg8[%c0_14, %c0_15] : memref<1x128xf32, #tpu.memory_space<vmem>>, vector<1x128xf32>
      %23 = vector.broadcast %22 : vector<1x128xf32> to vector<128x128xf32>
      %24 = arith.addf %21, %23 : vector<128x128xf32>
      %c128_i32 = arith.constant 128 : i32
      %25 = arith.muli %arg1, %c128_i32 : i32
      %26 = tpu.assume_multiple %25, 128 : i32
      %27 = arith.truncf %24 : vector<128x128xf32> to vector<128x128xbf16>
      %28 = arith.index_cast %26 : i32 to index
      %c0_16 = arith.constant 0 : index
      %29 = vector.load %arg12[%28, %c0_16] : memref<256x128xbf16, #tpu.memory_space<vmem>>, vector<128x128xbf16>
      tpu.vector_store %arg12[%28, %c0_16], %27 {strides = array<i32>} : memref<256x128xbf16, #tpu.memory_space<vmem>>, vector<128x128xbf16>,
      %cst_17 = arith.constant 0.000000e+00 : f32
      %30 = vector.broadcast %cst_17 : f32 to vector<128x128xf32>
      %c0_18 = arith.constant 0 : index
      %c0_19 = arith.constant 0 : index
      %31 = vector.load %arg10[%c0_18, %c0_19] : memref<128x128xf32, #tpu.memory_space<vmem>>, vector<128x128xf32>
      tpu.vector_store %arg10[%c0_18, %c0_19], %30 {strides = array<i32>} : memref<128x128xf32, #tpu.memory_space<vmem>>, vector<128x128xf32>,
    } else {
    }
    %c1_i32 = arith.constant 1 : i32
    %8 = arith.cmpi eq, %arg0, %c1_i32 : i32
    %9 = arith.extui %8 : i1 to i32
    %c0_i32_4 = arith.constant 0 : i32
    %10 = arith.cmpi ne, %9, %c0_i32_4 : i32
    scf.if %10 {
      %c0 = arith.constant 0 : index
      %c0_5 = arith.constant 0 : index
      %11 = vector.load %arg2[%c0, %c0_5] : memref<128x256xbf16, #tpu.memory_space<vmem>>, vector<128x256xbf16>
      %c0_6 = arith.constant 0 : index
      %c0_7 = arith.constant 0 : index
      %12 = vector.load %arg12[%c0_6, %c0_7] : memref<256x128xbf16, #tpu.memory_space<vmem>>, vector<256x128xbf16>
      %cst = arith.constant dense<0.000000e+00> : vector<128x128xf32>
      %13 = tpu.matmul %11, %12, %cst {dimension_numbers = #tpu.dot_dimension_numbers<[1], [0], [0], [1], [0, 0, 1, 1], [], []>} : vector<128x256xbf16>, vector<256x128xbf16>, vector<128x128xf32> -> vector<128x128xf32>
      %c0_8 = arith.constant 0 : index
      %c0_9 = arith.constant 0 : index
      %14 = vector.load %arg9[%c0_8, %c0_9] : memref<1x128xf32, #tpu.memory_space<vmem>>, vector<1x128xf32>
      %15 = vector.broadcast %14 : vector<1x128xf32> to vector<128x128xf32>
      %16 = arith.addf %13, %15 : vector<128x128xf32>
      %c0_10 = arith.constant 0 : index
      %c0_11 = arith.constant 0 : index
      %17 = vector.load %arg10[%c0_10, %c0_11] : memref<128x128xf32, #tpu.memory_space<vmem>>, vector<128x128xf32>
      tpu.vector_store %arg10[%c0_10, %c0_11], %16 {strides = array<i32>} : memref<128x128xf32, #tpu.memory_space<vmem>>, vector<128x128xf32>,
    } else {
    }
    return
  }
  func.func @transform_0(%arg0: i32, %arg1: i32) -> (i32, i32) {
    %c0_i32 = arith.constant 0 : i32
    %c0_i32_0 = arith.constant 0 : i32
    return %arg1, %c0_i32 : i32, i32
  }
  func.func @transform_1(%arg0: i32, %arg1: i32) -> (i32, i32) {
    %c0_i32 = arith.constant 0 : i32
    %c0_i32_0 = arith.constant 0 : i32
    %c0_i32_1 = arith.constant 0 : i32
    return %c0_i32, %c0_i32_0 : i32, i32
  }
  func.func @transform_2(%arg0: i32, %arg1: i32) -> (i32, i32) {
    %c0_i32 = arith.constant 0 : i32
    %c0_i32_0 = arith.constant 0 : i32
    %c0_i32_1 = arith.constant 0 : i32
    return %c0_i32, %c0_i32_0 : i32, i32
  }
  func.func @transform_3(%arg0: i32, %arg1: i32) -> (i32, i32) {
    %c0_i32 = arith.constant 0 : i32
    %c0_i32_0 = arith.constant 0 : i32
    %c0_i32_1 = arith.constant 0 : i32
    return %c0_i32, %c0_i32_0 : i32, i32
  }
  func.func @transform_4(%arg0: i32, %arg1: i32) -> (i32, i32) {
    %c0_i32 = arith.constant 0 : i32
    %c0_i32_0 = arith.constant 0 : i32
    %c0_i32_1 = arith.constant 0 : i32
    return %c0_i32, %c0_i32_0 : i32, i32
  }
  func.func @transform_5(%arg0: i32, %arg1: i32) -> (i32, i32) {
    %c0_i32 = arith.constant 0 : i32
    %c0_i32_0 = arith.constant 0 : i32
    %c0_i32_1 = arith.constant 0 : i32
    return %c0_i32, %c0_i32_0 : i32, i32
  }
  func.func @transform_6(%arg0: i32, %arg1: i32) -> (i32, i32) {
    %c0_i32 = arith.constant 0 : i32
    %c0_i32_0 = arith.constant 0 : i32
    %c0_i32_1 = arith.constant 0 : i32
    return %c0_i32, %c0_i32_0 : i32, i32
  }
  func.func @transform_7(%arg0: i32, %arg1: i32) -> (i32, i32) {
    %c0_i32 = arith.constant 0 : i32
    %c0_i32_0 = arith.constant 0 : i32
    %c0_i32_1 = arith.constant 0 : i32
    return %c0_i32, %c0_i32_0 : i32, i32
  }
  func.func @transform_8(%arg0: i32, %arg1: i32) -> (i32, i32) {
    %c0_i32 = arith.constant 0 : i32
    %c0_i32_0 = arith.constant 0 : i32
    return %arg1, %c0_i32 : i32, i32
  }
}

</mosaic_0001>

<llo_original>
// kernel: tpu_custom_call.1
$region0: #{tpu_custom_call.1}
  #allocation0 [shape = 'u32[]', space=smem, size = 0x4, offset = 0x4, fixed_abs, tag = 'smem constant byte address 0x4 - core index']
  #allocation1 [shape = 'u32[144,128]{1,0:T(1,128)}', space=vmem, size = 0x12000, scoped, tag = 'internal scratch']
  #allocation2 [shape = 'bf16[256,128]{1,0:T(16,128)(2,1)}', space=vmem, size = 0x10000, scoped, tag = 'scratch operand']
  #allocation3 [shape = 'bf16[256,128]{1,0:T(16,128)(2,1)}', space=vmem, size = 0x10000, scoped, tag = 'scratch operand']
  %s0 = inlined_call_operand.hbm [shape: bf16[256,256], index: 0, kind: input, shape index: {}]
  %s1 = inlined_call_operand.hbm [shape: bf16[256,128], index: 1, kind: input, shape index: {}]
  %s2 = inlined_call_operand.hbm [shape: bf16[128,128], index: 2, kind: input, shape index: {}]
  %s3 = inlined_call_operand.vmem [shape: f32[1,128], index: 3, kind: input, shape index: {}]
  %s4 = inlined_call_operand.vmem [shape: f32[1,128], index: 4, kind: input, shape index: {}]
  %s5 = inlined_call_operand.hbm [shape: bf16[128,128], index: 5, kind: input, shape index: {}]
  %s6 = inlined_call_operand.vmem [shape: f32[1,128], index: 6, kind: input, shape index: {}]
  %s7 = inlined_call_operand.vmem [shape: f32[1,128], index: 7, kind: input, shape index: {}]
  %s8 = inlined_call_operand.hbm [shape: f32[256,128], index: 8, kind: output, shape index: {}]
  %s9 = sld [smem:[#allocation0]]
  $region93: #{tpu_custom_call.1} parent=0
    _
  %s11 = ssub.s32 1, %s9
  %s12 = scalar_select 0, %s11, %s9
  $region1: #{tpu_custom_call.1} parent=0
    #allocation4 [shape = 'u8[131072]{0}', space=vmem, size = 0x20000, scoped, tag = 'input window, operand 0']
    #allocation5 [shape = 's32[2]{0}', space=sflag, size = 0x8, scoped, tag = 'scoped memory for tpu_custom_call.1']
    #allocation6 [shape = 's32[2]{0}', space=sflag, size = 0x8, scoped, tag = 'scoped memory for tpu_custom_call.1']
    #allocation7 [shape = 'u8[65536]{0}', space=vmem, size = 0x10000, scoped, tag = 'input window, operand 1, single buffered']
    #allocation8 [shape = 's32[1]{0}', space=sflag, size = 0x4, scoped, tag = 'scoped memory for tpu_custom_call.1']
    #allocation9 [shape = 'u8[32768]{0}', space=vmem, size = 0x8000, scoped, tag = 'input window, operand 2, single buffered']
    #allocation10 [shape = 'u8[32768]{0}', space=vmem, size = 0x8000, scoped, tag = 'input window, operand 5, single buffered']
    #allocation11 [shape = 's32[1]{0}', space=sflag, size = 0x4, scoped, tag = 'scoped memory for tpu_custom_call.1']
    #allocation12 [shape = 'u8[131072]{0}', space=vmem, size = 0x20000, scoped, tag = 'output window, operand 0']
    %13 = vsyncpa [#allocation5], 0
    %s14 = scalar_lea.sflag [#allocation5], 1
    %15 = vsyncpa %s14, 0
    %16 = vsyncpa [#allocation8], 0
    %17 = vsyncpa [#allocation11], 0
    %18 = vsyncpa [#allocation6], 0
    %s19 = scalar_lea.sflag [#allocation6], 1
    %20 = vsyncpa %s19, 0
    loop: start=0, step=1, limit=6
    $region2: #{tpu_custom_call.1} parent=1 // loop_pre_header
      _
    $region3: #{tpu_custom_call.1} parent=1 // loop_header
      %s22 = sphi 0, %s26
      %p23 = scmp.ge.s32.totalorder %s22, 6
      %s29 = sphi 0, %s41
      %s30 = sphi 0, %s37
      %s31 = sphi 0, %s29
      %s32 = sphi 0, %s30
      %s33 = sphi 0, %s31
      %s34 = sphi 0, %s32
      %s44 = sphi 0, %s46
      %s47 = sphi 0, %s44
      %s48 = sphi 0, %s47
      %s64 = sphi 0, %s48
      %s68 = sphi 0, %s68
      %s70 = sphi 0, %s68
      %s71 = sphi 0, %s70
      %s85 = sphi 0, %s71
      %s89 = sphi 0, %s89
      %s91 = sphi 0, %s89
      %s92 = sphi 0, %s91
      %s106 = sphi 0, %s92
      %s110 = sphi 0, %s110
      %s112 = sphi 0, %s110
      %s113 = sphi 0, %s112
      %s127 = sphi 0, %s113
      %s131 = sphi 0, %s131
      %s133 = sphi 0, %s131
      %s134 = sphi 0, %s133
      %s148 = sphi 0, %s134
      %s152 = sphi 0, %s152
      %s154 = sphi 0, %s152
      %s155 = sphi 0, %s154
      %s169 = sphi 0, %s155
      %s173 = sphi 0, %s173
      %s175 = sphi 0, %s173
      %s176 = sphi 0, %s175
      %s190 = sphi 0, %s176
      %s194 = sphi 0, %s194
      %s196 = sphi 0, %s194
      %s197 = sphi 0, %s196
      %s211 = sphi 0, %s197
      %s217 = sphi 0, %s219
      %s220 = sphi 0, %s217
      %s221 = sphi 0, %s220
      %s237 = sphi 0, %s221
    $region4: #{tpu_custom_call.1} parent=1 // loop_header_branch
      %25 = sbr.rel (%p23) target = $region8
    $region5: #{tpu_custom_call.1} parent=1 // loop_body
      %s27 = ssub.s32 %s22, 1
      %s28 = ssub.s32 %s22, 2
      %s35 = sadd.s32 1, %s30
      %p36 = scmp.ge.s32.totalorder %s35, 2
      %s37 = scalar_select %p36, 0, %s35
      %s38 = sadd.s32 1, %s29
      %s39 = scalar_select %p36, %s38, %s29
      %p40 = scmp.ge.s32.totalorder %s39, 2
      %s41 = scalar_select %p40, 0, %s39
      %s42 = ssub.s32 %s30, %s37
      %p43 = scmp.eq.s32.totalorder %s42, 0
      %s45 = sadd.s32 %s44, 1
      %s46 = scalar_select %p43, %s44, %s45
      %p49 = pneg %p43
      %p50 = scmp.eq.s32.totalorder %s22, 3
      %p51 = por %p49, %p50
      %p52 = scmp.ne.s32.totalorder %s44, %s47
      %p53 = scmp.eq.s32.totalorder %s22, 0
      %p54 = por %p52, %p53
      %p55 = scmp.ne.s32.totalorder %s44, %s47
      %p56 = scmp.eq.s32.totalorder %s27, 3
      %p57 = por %p55, %p56
      %p58 = scmp.ne.s32.totalorder %s47, %s48
      %p59 = scmp.eq.s32.totalorder %s27, 0
      %p60 = por %p58, %p59
      %p61 = scmp.ne.s32.totalorder %s47, %s48
      %p62 = scmp.eq.s32.totalorder %s28, 3
      %p63 = por %p61, %p62
      %p65 = scmp.ne.s32.totalorder %s48, %s64
      %p66 = scmp.eq.s32.totalorder %s28, 0
      %p67 = por %p65, %p66
      %s69 = sadd.s32 %s68, 1
      %p72 = scmp.eq.s32.totalorder %s22, 3
      %p73 = scmp.ne.s32.totalorder %s68, %s70
      %p74 = scmp.eq.s32.totalorder %s22, 0
      %p75 = por %p73, %p74
      %p76 = scmp.ne.s32.totalorder %s68, %s70
      %p77 = scmp.eq.s32.totalorder %s27, 3
      %p78 = por %p76, %p77
      %p79 = scmp.ne.s32.totalorder %s70, %s71
      %p80 = scmp.eq.s32.totalorder %s27, 0
      %p81 = por %p79, %p80
      %p82 = scmp.ne.s32.totalorder %s70, %s71
      %p83 = scmp.eq.s32.totalorder %s28, 3
      %p84 = por %p82, %p83
      %p86 = scmp.ne.s32.totalorder %s71, %s85
      %p87 = scmp.eq.s32.totalorder %s28, 0
      %p88 = por %p86, %p87
      %s90 = sadd.s32 %s89, 1
      %p93 = scmp.eq.s32.totalorder %s22, 3
      %p94 = scmp.ne.s32.totalorder %s89, %s91
      %p95 = scmp.eq.s32.totalorder %s22, 0
      %p96 = por %p94, %p95
      %p97 = scmp.ne.s32.totalorder %s89, %s91
      %p98 = scmp.eq.s32.totalorder %s27, 3
      %p99 = por %p97, %p98
      %p100 = scmp.ne.s32.totalorder %s91, %s92
      %p101 = scmp.eq.s32.totalorder %s27, 0
      %p102 = por %p100, %p101
      %p103 = scmp.ne.s32.totalorder %s91, %s92
      %p104 = scmp.eq.s32.totalorder %s28, 3
      %p105 = por %p103, %p104
      %p107 = scmp.ne.s32.totalorder %s92, %s106
      %p108 = scmp.eq.s32.totalorder %s28, 0
      %p109 = por %p107, %p108
      %s111 = sadd.s32 %s110, 1
      %p114 = scmp.eq.s32.totalorder %s22, 3
      %p115 = scmp.ne.s32.totalorder %s110, %s112
      %p116 = scmp.eq.s32.totalorder %s22, 0
      %p117 = por %p115, %p116
      %p118 = scmp.ne.s32.totalorder %s110, %s112
      %p119 = scmp.eq.s32.totalorder %s27, 3
      %p120 = por %p118, %p119
      %p121 = scmp.ne.s32.totalorder %s112, %s113
      %p122 = scmp.eq.s32.totalorder %s27, 0
      %p123 = por %p121, %p122
      %p124 = scmp.ne.s32.totalorder %s112, %s113
      %p125 = scmp.eq.s32.totalorder %s28, 3
      %p126 = por %p124, %p125
      %p128 = scmp.ne.s32.totalorder %s113, %s127
      %p129 = scmp.eq.s32.totalorder %s28, 0
      %p130 = por %p128, %p129
      %s132 = sadd.s32 %s131, 1
      %p135 = scmp.eq.s32.totalorder %s22, 3
      %p136 = scmp.ne.s32.totalorder %s131, %s133
      %p137 = scmp.eq.s32.totalorder %s22, 0
      %p138 = por %p136, %p137
      %p139 = scmp.ne.s32.totalorder %s131, %s133
      %p140 = scmp.eq.s32.totalorder %s27, 3
      %p141 = por %p139, %p140
      %p142 = scmp.ne.s32.totalorder %s133, %s134
      %p143 = scmp.eq.s32.totalorder %s27, 0
      %p144 = por %p142, %p143
      %p145 = scmp.ne.s32.totalorder %s133, %s134
      %p146 = scmp.eq.s32.totalorder %s28, 3
      %p147 = por %p145, %p146
      %p149 = scmp.ne.s32.totalorder %s134, %s148
      %p150 = scmp.eq.s32.totalorder %s28, 0
      %p151 = por %p149, %p150
      %s153 = sadd.s32 %s152, 1
      %p156 = scmp.eq.s32.totalorder %s22, 3
      %p157 = scmp.ne.s32.totalorder %s152, %s154
      %p158 = scmp.eq.s32.totalorder %s22, 0
      %p159 = por %p157, %p158
      %p160 = scmp.ne.s32.totalorder %s152, %s154
      %p161 = scmp.eq.s32.totalorder %s27, 3
      %p162 = por %p160, %p161
      %p163 = scmp.ne.s32.totalorder %s154, %s155
      %p164 = scmp.eq.s32.totalorder %s27, 0
      %p165 = por %p163, %p164
      %p166 = scmp.ne.s32.totalorder %s154, %s155
      %p167 = scmp.eq.s32.totalorder %s28, 3
      %p168 = por %p166, %p167
      %p170 = scmp.ne.s32.totalorder %s155, %s169
      %p171 = scmp.eq.s32.totalorder %s28, 0
      %p172 = por %p170, %p171
      %s174 = sadd.s32 %s173, 1
      %p177 = scmp.eq.s32.totalorder %s22, 3
      %p178 = scmp.ne.s32.totalorder %s173, %s175
      %p179 = scmp.eq.s32.totalorder %s22, 0
      %p180 = por %p178, %p179
      %p181 = scmp.ne.s32.totalorder %s173, %s175
      %p182 = scmp.eq.s32.totalorder %s27, 3
      %p183 = por %p181, %p182
      %p184 = scmp.ne.s32.totalorder %s175, %s176
      %p185 = scmp.eq.s32.totalorder %s27, 0
      %p186 = por %p184, %p185
      %p187 = scmp.ne.s32.totalorder %s175, %s176
      %p188 = scmp.eq.s32.totalorder %s28, 3
      %p189 = por %p187, %p188
      %p191 = scmp.ne.s32.totalorder %s176, %s190
      %p192 = scmp.eq.s32.totalorder %s28, 0
      %p193 = por %p191, %p192
      %s195 = sadd.s32 %s194, 1
      %p198 = scmp.eq.s32.totalorder %s22, 3
      %p199 = scmp.ne.s32.totalorder %s194, %s196
      %p200 = scmp.eq.s32.totalorder %s22, 0
      %p201 = por %p199, %p200
      %p202 = scmp.ne.s32.totalorder %s194, %s196
      %p203 = scmp.eq.s32.totalorder %s27, 3
      %p204 = por %p202, %p203
      %p205 = scmp.ne.s32.totalorder %s196, %s197
      %p206 = scmp.eq.s32.totalorder %s27, 0
      %p207 = por %p205, %p206
      %p208 = scmp.ne.s32.totalorder %s196, %s197
      %p209 = scmp.eq.s32.totalorder %s28, 3
      %p210 = por %p208, %p209
      %p212 = scmp.ne.s32.totalorder %s197, %s211
      %p213 = scmp.eq.s32.totalorder %s28, 0
      %p214 = por %p212, %p213
      %s215 = ssub.s32 %s30, %s37
      %p216 = scmp.eq.s32.totalorder %s215, 0
      %s218 = sadd.s32 %s217, 1
      %s219 = scalar_select %p216, %s217, %s218
      %p222 = pneg %p216
      %p223 = scmp.eq.s32.totalorder %s22, 3
      %p224 = por %p222, %p223
      %p225 = scmp.ne.s32.totalorder %s217, %s220
      %p226 = scmp.eq.s32.totalorder %s22, 0
      %p227 = por %p225, %p226
      %p228 = scmp.ne.s32.totalorder %s217, %s220
      %p229 = scmp.eq.s32.totalorder %s27, 3
      %p230 = por %p228, %p229
      %p231 = scmp.ne.s32.totalorder %s220, %s221
      %p232 = scmp.eq.s32.totalorder %s27, 0
      %p233 = por %p231, %p232
      %p234 = scmp.ne.s32.totalorder %s220, %s221
      %p235 = scmp.eq.s32.totalorder %s28, 3
      %p236 = por %p234, %p235
      %p238 = scmp.ne.s32.totalorder %s221, %s237
      %p239 = scmp.eq.s32.totalorder %s28, 0
      %p240 = por %p238, %p239
      %p241 = scmp.le.s32.totalorder 1, %s22
      %p242 = scmp.lt.s32.totalorder %s22, 5
      %p243 = pnand %p241, %p242
      %p244 = pneg %p243
      // Predicated region
      $region9: #{tpu_custom_call.1} parent=5 // pred_check
        _
      $region10: #{tpu_custom_call.1} parent=5 // pred_check_branch
        %246 = sbr.rel (%p243) target = $region12
      $region11: #{tpu_custom_call.1} parent=5 // pred_region
        %s247 = ssub.s32 %s22, 1
        // Predicated region
        $region13: #{tpu_custom_call.1} parent=11 // pred_check
          %p248 = pneg %p81
        $region14: #{tpu_custom_call.1} parent=11 // pred_check_branch
          %250 = sbr.rel (%p248) target = $region16
        $region15: #{tpu_custom_call.1} parent=11 // pred_region
          %s252 = ssub.s32 2048, 2048
          %253 = vsyncadd [#allocation8], %s252
          %s254 = sshll.u32 [#allocation7], 4
          %s255 = int_to_ptr.vmem [resolvable:$true] %s254
          %260 = dma.hbm_to_vmem [thread:$0]  %s1, 2048, %s255, [#allocation8], 64, 64, 4
        $region16: #{tpu_custom_call.1} parent=11 // pred_fallthru
          _
        // Predicated region
        $region17: #{tpu_custom_call.1} parent=11 // pred_check
          %p261 = pneg %p102
        $region18: #{tpu_custom_call.1} parent=11 // pred_check_branch
          %263 = sbr.rel (%p261) target = $region20
        $region19: #{tpu_custom_call.1} parent=11 // pred_region
          %s265 = ssub.s32 1024, 1024
          %266 = vsyncadd [#allocation8], %s265
          %s267 = sshll.u32 [#allocation9], 4
          %s268 = int_to_ptr.vmem [resolvable:$true] %s267
          %273 = dma.hbm_to_vmem [thread:$0]  %s2, 1024, %s268, [#allocation8], 64, 64, 4
        $region20: #{tpu_custom_call.1} parent=11 // pred_fallthru
          _
        // Predicated region
        $region21: #{tpu_custom_call.1} parent=11 // pred_check
          %p274 = pneg %p123
        $region22: #{tpu_custom_call.1} parent=11 // pred_check_branch
          %276 = sbr.rel (%p274) target = $region24
        $region23: #{tpu_custom_call.1} parent=11 // pred_region
          _
        $region24: #{tpu_custom_call.1} parent=11 // pred_fallthru
          _
        // Predicated region
        $region25: #{tpu_custom_call.1} parent=11 // pred_check
          %p277 = pneg %p144
        $region26: #{tpu_custom_call.1} parent=11 // pred_check_branch
          %279 = sbr.rel (%p277) target = $region28
        $region27: #{tpu_custom_call.1} parent=11 // pred_region
          _
        $region28: #{tpu_custom_call.1} parent=11 // pred_fallthru
          _
        // Predicated region
        $region29: #{tpu_custom_call.1} parent=11 // pred_check
          %p280 = pneg %p165
        $region30: #{tpu_custom_call.1} parent=11 // pred_check_branch
          %282 = sbr.rel (%p280) target = $region32
        $region31: #{tpu_custom_call.1} parent=11 // pred_region
          %s284 = ssub.s32 1024, 1024
          %285 = vsyncadd [#allocation11], %s284
          %s286 = sshll.u32 [#allocation10], 4
          %s287 = int_to_ptr.vmem [resolvable:$true] %s286
          %292 = dma.hbm_to_vmem [thread:$0]  %s5, 1024, %s287, [#allocation11], 64, 64, 4
        $region32: #{tpu_custom_call.1} parent=11 // pred_fallthru
          _
        // Predicated region
        $region33: #{tpu_custom_call.1} parent=11 // pred_check
          %p293 = pneg %p186
        $region34: #{tpu_custom_call.1} parent=11 // pred_check_branch
          %295 = sbr.rel (%p293) target = $region36
        $region35: #{tpu_custom_call.1} parent=11 // pred_region
          _
        $region36: #{tpu_custom_call.1} parent=11 // pred_fallthru
          _
        // Predicated region
        $region37: #{tpu_custom_call.1} parent=11 // pred_check
          %p296 = pneg %p207
        $region38: #{tpu_custom_call.1} parent=11 // pred_check_branch
          %298 = sbr.rel (%p296) target = $region40
        $region39: #{tpu_custom_call.1} parent=11 // pred_region
          _
        $region40: #{tpu_custom_call.1} parent=11 // pred_fallthru
          _
      $region12: #{tpu_custom_call.1} parent=5 // pred_fallthru
        _
      %p299 = scmp.lt.s32.totalorder %s22, 4
      // Predicated region
      $region41: #{tpu_custom_call.1} parent=5 // pred_check
        %p300 = pneg %p299
      $region42: #{tpu_custom_call.1} parent=5 // pred_check_branch
        %302 = sbr.rel (%p300) target = $region44
      $region43: #{tpu_custom_call.1} parent=5 // pred_region
        // Predicated region
        $region45: #{tpu_custom_call.1} parent=43 // pred_check
          %p303 = pneg %p54
        $region46: #{tpu_custom_call.1} parent=43 // pred_check_branch
          %305 = sbr.rel (%p303) target = $region48
        $region47: #{tpu_custom_call.1} parent=43 // pred_region
          %s306 = sand.u32 %s44, 1
          %s307 = scalar_lea.sflag [#allocation5], %s306
          %s308 = sand.u32 %s44, 1
          %s309 = smul.addr %s308, 128
          %s310 = scalar_lea.vmem [#allocation4], %s309
          %s311 = smul.u32 16, %s30
          %s313 = ssub.s32 2048, 2048
          %314 = vsyncadd %s307, %s313
          %s315 = smul.addr %s311, 2
          %s316 = smul.addr %s315, 64
          %s317 = scalar_lea.hbm %s0, %s316
          %s318 = sshll.u32 %s310, 4
          %s319 = int_to_ptr.vmem [resolvable:$true] %s318
          %324 = dma.hbm_to_vmem [thread:$0]  %s317, 2048, %s319, %s307, 128, 128, 8
        $region48: #{tpu_custom_call.1} parent=43 // pred_fallthru
          _
      $region44: #{tpu_custom_call.1} parent=5 // pred_fallthru
        _
      %p325 = scmp.le.s32.totalorder 1, %s22
      %p326 = scmp.lt.s32.totalorder %s22, 5
      %p327 = pnand %p325, %p326
      %p328 = pneg %p327
      // Predicated region
      $region49: #{tpu_custom_call.1} parent=5 // pred_check
        _
      $region50: #{tpu_custom_call.1} parent=5 // pred_check_branch
        %330 = sbr.rel (%p327) target = $region52
      $region51: #{tpu_custom_call.1} parent=5 // pred_region
        %s331 = ssub.s32 %s22, 1
        %s332 = sand.u32 %s47, 1
        %s333 = scalar_lea.sflag [#allocation5], %s332
        %s334 = sand.u32 %s47, 1
        %s335 = smul.addr %s334, 128
        %s336 = scalar_lea.vmem [#allocation4], %s335
        // Predicated region
        $region53: #{tpu_custom_call.1} parent=51 // pred_check
          %p337 = pneg %p60
        $region54: #{tpu_custom_call.1} parent=51 // pred_check_branch
          %339 = sbr.rel (%p337) target = $region56
        $region55: #{tpu_custom_call.1} parent=51 // pred_region
          %340 = dma.done %s333, 2048
        $region56: #{tpu_custom_call.1} parent=51 // pred_fallthru
          _
        // Predicated region
        $region57: #{tpu_custom_call.1} parent=51 // pred_check
          %p341 = pneg %p81
        $region58: #{tpu_custom_call.1} parent=51 // pred_check_branch
          %343 = sbr.rel (%p341) target = $region60
        $region59: #{tpu_custom_call.1} parent=51 // pred_region
          %344 = dma.done [#allocation8], 2048
        $region60: #{tpu_custom_call.1} parent=51 // pred_fallthru
          _
        // Predicated region
        $region61: #{tpu_custom_call.1} parent=51 // pred_check
          %p345 = pneg %p102
        $region62: #{tpu_custom_call.1} parent=51 // pred_check_branch
          %347 = sbr.rel (%p345) target = $region64
        $region63: #{tpu_custom_call.1} parent=51 // pred_region
          %348 = dma.done [#allocation8], 1024
        $region64: #{tpu_custom_call.1} parent=51 // pred_fallthru
          _
        // Predicated region
        $region65: #{tpu_custom_call.1} parent=51 // pred_check
          %p349 = pneg %p165
        $region66: #{tpu_custom_call.1} parent=51 // pred_check_branch
          %351 = sbr.rel (%p349) target = $region68
        $region67: #{tpu_custom_call.1} parent=51 // pred_region
          %352 = dma.done [#allocation11], 1024
        $region68: #{tpu_custom_call.1} parent=51 // pred_fallthru
          _
        %s353 = sand.u32 %s47, 1
        %s354 = scalar_lea.sflag [#allocation5], %s353
        %s355 = sand.u32 %s47, 1
        %s356 = smul.addr %s355, 128
        %s357 = scalar_lea.vmem [#allocation4], %s356
        %p358 = pneg %p60
        %p359 = pneg %p57
        %p360 = pneg %p81
        %p361 = pneg %p78
        %p362 = pneg %p102
        %p363 = pneg %p99
        %p364 = pneg %p123
        %p365 = pneg %p120
        %p366 = pneg %p144
        %p367 = pneg %p141
        %p368 = pneg %p165
        %p369 = pneg %p162
        %p370 = pneg %p186
        %p371 = pneg %p183
        %p372 = pneg %p207
        %p373 = pneg %p204
        %p374 = pneg %p233
        %p375 = pneg %p230
        %s376 = sand.u32 %s220, 1
        %s377 = scalar_lea.sflag [#allocation6], %s376
        %s378 = sand.u32 %s220, 1
        %s379 = smul.addr %s378, 128
        %s380 = scalar_lea.vmem [#allocation12], %s379
        %s381 = smul.u32 16, %s32
        %s382 = smul.u32 16, %s32
        %p384 = scmp.eq.s32.totalorder %s31, 0
        %p385 = scmp.eq.s32.totalorder %s32, 0
        %p386 = pnand %p384, %p385
        %p387 = pneg %p386
        // Predicated region
        $region69: #{tpu_custom_call.1} parent=51 // pred_check
          _
        $region70: #{tpu_custom_call.1} parent=51 // pred_check_branch
          %389 = sbr.rel (%p386) target = $region72
        $region71: #{tpu_custom_call.1} parent=51 // pred_region
          %v390 = vld [vmem:[#allocation7] sm:$0xf]
          %v391 = vld [vmem:[#allocation7 + $0x4] sm:$0xf]
          %v392 = vld [vmem:[#allocation7 + $0x8] sm:$0xf]
          %v393 = vld [vmem:[#allocation7 + $0xc] sm:$0xf]
          %v394 = vld [vmem:[#allocation7 + $0x10] sm:$0xf]
          %v395 = vld [vmem:[#allocation7 + $0x14] sm:$0xf]
          %v396 = vld [vmem:[#allocation7 + $0x18] sm:$0xf]
          %v397 = vld [vmem:[#allocation7 + $0x1c] sm:$0xf]
          %v398 = vld [vmem:[#allocation7 + $0x20] sm:$0xf]
          %v399 = vld [vmem:[#allocation7 + $0x24] sm:$0xf]
          %v400 = vld [vmem:[#allocation7 + $0x28] sm:$0xf]
          %v401 = vld [vmem:[#allocation7 + $0x2c] sm:$0xf]
          %v402 = vld [vmem:[#allocation7 + $0x30] sm:$0xf]
          %v403 = vld [vmem:[#allocation7 + $0x34] sm:$0xf]
          %v404 = vld [vmem:[#allocation7 + $0x38] sm:$0xf]
          %v405 = vld [vmem:[#allocation7 + $0x3c] sm:$0xf]
          %v406 = vld [vmem:[#allocation7 + $0x40] sm:$0xf]
          %v407 = vld [vmem:[#allocation7 + $0x44] sm:$0xf]
          %v408 = vld [vmem:[#allocation7 + $0x48] sm:$0xf]
          %v409 = vld [vmem:[#allocation7 + $0x4c] sm:$0xf]
          %v410 = vld [vmem:[#allocation7 + $0x50] sm:$0xf]
          %v411 = vld [vmem:[#allocation7 + $0x54] sm:$0xf]
          %v412 = vld [vmem:[#allocation7 + $0x58] sm:$0xf]
          %v413 = vld [vmem:[#allocation7 + $0x5c] sm:$0xf]
          %v414 = vld [vmem:[#allocation7 + $0x60] sm:$0xf]
          %v415 = vld [vmem:[#allocation7 + $0x64] sm:$0xf]
          %v416 = vld [vmem:[#allocation7 + $0x68] sm:$0xf]
          %v417 = vld [vmem:[#allocation7 + $0x6c] sm:$0xf]
          %v418 = vld [vmem:[#allocation7 + $0x70] sm:$0xf]
          %v419 = vld [vmem:[#allocation7 + $0x74] sm:$0xf]
          %v420 = vld [vmem:[#allocation7 + $0x78] sm:$0xf]
          %v421 = vld [vmem:[#allocation7 + $0x7c] sm:$0xf]
          %v422 = vld [vmem:[#allocation9] sm:$0xf]
          %v423 = vld [vmem:[#allocation9 + $0x4] sm:$0xf]
          %v424 = vld [vmem:[#allocation9 + $0x8] sm:$0xf]
          %v425 = vld [vmem:[#allocation9 + $0xc] sm:$0xf]
          %v426 = vld [vmem:[#allocation9 + $0x10] sm:$0xf]
          %v427 = vld [vmem:[#allocation9 + $0x14] sm:$0xf]
          %v428 = vld [vmem:[#allocation9 + $0x18] sm:$0xf]
          %v429 = vld [vmem:[#allocation9 + $0x1c] sm:$0xf]
          %v430 = vld [vmem:[#allocation9 + $0x20] sm:$0xf]
          %v431 = vld [vmem:[#allocation9 + $0x24] sm:$0xf]
          %v432 = vld [vmem:[#allocation9 + $0x28] sm:$0xf]
          %v433 = vld [vmem:[#allocation9 + $0x2c] sm:$0xf]
          %v434 = vld [vmem:[#allocation9 + $0x30] sm:$0xf]
          %v435 = vld [vmem:[#allocation9 + $0x34] sm:$0xf]
          %v436 = vld [vmem:[#allocation9 + $0x38] sm:$0xf]
          %v437 = vld [vmem:[#allocation9 + $0x3c] sm:$0xf]
          %v438 = vld [vmem:[%s3] sm:$0x1]
          %v440 = vlaneseq
          %v441 = vshrl.u32 %v440, 7
          %v442 = vsub.s32 0, %v441
          %v443 = vrot.slane %v438, %v442
          %v477 = vunpack.c.l.b16 %v390
          %v478 = vunpack.c.l.b16 %v391
          %v479 = vunpack.c.l.b16 %v392
          %v480 = vunpack.c.l.b16 %v393
          %v481 = vunpack.c.l.b16 %v394
          %v482 = vunpack.c.l.b16 %v395
          %v483 = vunpack.c.l.b16 %v396
          %v484 = vunpack.c.l.b16 %v397
          %v485 = vunpack.c.l.b16 %v398
          %v486 = vunpack.c.l.b16 %v399
          %v487 = vunpack.c.l.b16 %v400
          %v488 = vunpack.c.l.b16 %v401
          %v489 = vunpack.c.l.b16 %v402
          %v490 = vunpack.c.l.b16 %v403
          %v491 = vunpack.c.l.b16 %v404
          %v492 = vunpack.c.l.b16 %v405
          %v493 = vunpack.c.l.b16 %v406
          %v494 = vunpack.c.l.b16 %v407
          %v495 = vunpack.c.l.b16 %v408
          %v496 = vunpack.c.l.b16 %v409
          %v497 = vunpack.c.l.b16 %v410
          %v498 = vunpack.c.l.b16 %v411
          %v499 = vunpack.c.l.b16 %v412
          %v500 = vunpack.c.l.b16 %v413
          %v501 = vunpack.c.l.b16 %v414
          %v502 = vunpack.c.l.b16 %v415
          %v503 = vunpack.c.l.b16 %v416
          %v504 = vunpack.c.l.b16 %v417
          %v505 = vunpack.c.l.b16 %v418
          %v506 = vunpack.c.l.b16 %v419
          %v507 = vunpack.c.l.b16 %v420
          %v508 = vunpack.c.l.b16 %v421
          %v509 = vpack.c.b16 %v478, %v477
          %v510 = vpack.c.b16 %v480, %v479
          %v511 = vpack.c.b16 %v482, %v481
          %v512 = vpack.c.b16 %v484, %v483
          %v513 = vpack.c.b16 %v486, %v485
          %v514 = vpack.c.b16 %v488, %v487
          %v515 = vpack.c.b16 %v490, %v489
          %v516 = vpack.c.b16 %v492, %v491
          %v517 = vpack.c.b16 %v494, %v493
          %v518 = vpack.c.b16 %v496, %v495
          %v519 = vpack.c.b16 %v498, %v497
          %v520 = vpack.c.b16 %v500, %v499
          %v521 = vpack.c.b16 %v502, %v501
          %v522 = vpack.c.b16 %v504, %v503
          %v523 = vpack.c.b16 %v506, %v505
          %v524 = vpack.c.b16 %v508, %v507
          %v557 = vunpack.c.l.b16 %v422
          %v558 = vunpack.c.l.b16 %v423
          %v559 = vunpack.c.l.b16 %v424
          %v560 = vunpack.c.l.b16 %v425
          %v561 = vunpack.c.l.b16 %v426
          %v562 = vunpack.c.l.b16 %v427
          %v563 = vunpack.c.l.b16 %v428
          %v564 = vunpack.c.l.b16 %v429
          %v565 = vunpack.c.l.b16 %v430
          %v566 = vunpack.c.l.b16 %v431
          %v567 = vunpack.c.l.b16 %v432
          %v568 = vunpack.c.l.b16 %v433
          %v569 = vunpack.c.l.b16 %v434
          %v570 = vunpack.c.l.b16 %v435
          %v571 = vunpack.c.l.b16 %v436
          %v572 = vunpack.c.l.b16 %v437
          %v573 = vpack.c.b16 %v558, %v557
          %v574 = vpack.c.b16 %v560, %v559
          %v575 = vpack.c.b16 %v562, %v561
          %v576 = vpack.c.b16 %v564, %v563
          %v577 = vpack.c.b16 %v566, %v565
          %v578 = vpack.c.b16 %v568, %v567
          %v579 = vpack.c.b16 %v570, %v569
          %v580 = vpack.c.b16 %v572, %v571
          %589 = vmatprep.subr.bf16.mxu0 0
          %590 = vmatpush1.bf16.msra.mxu0 %v573
          %591 = vmatprep.subr.bf16.mxu0 0
          %592 = vmatpush1.bf16.msra.mxu0 %v574
          %593 = vmatprep.subr.bf16.mxu0 0
          %594 = vmatpush1.bf16.msra.mxu0 %v575
          %595 = vmatprep.subr.bf16.mxu0 0
          %596 = vmatpush1.bf16.msra.mxu0 %v576
          %597 = vmatprep.subr.bf16.mxu0 0
          %598 = vmatpush1.bf16.msra.mxu0 %v577
          %599 = vmatprep.subr.bf16.mxu0 0
          %600 = vmatpush1.bf16.msra.mxu0 %v578
          %601 = vmatprep.subr.bf16.mxu0 0
          %602 = vmatpush1.bf16.msra.mxu0 %v579
          %603 = vmatprep.subr.bf16.mxu0 0
          %604 = vmatpush1.bf16.msra.mxu0 %v580
          %605 = vmatprep.subr.bf16.mxu0 0
          %606 = vmatpush1.bf16.msra.mxu0 0
          %607 = vmatprep.subr.bf16.mxu0 0
          %608 = vmatpush1.bf16.msra.mxu0 0
          %609 = vmatprep.subr.bf16.mxu0 0
          %610 = vmatpush1.bf16.msra.mxu0 0
          %611 = vmatprep.subr.bf16.mxu0 0
          %612 = vmatpush1.bf16.msra.mxu0 0
          %613 = vmatprep.subr.bf16.mxu0 0
          %614 = vmatpush1.bf16.msra.mxu0 0
          %615 = vmatprep.subr.bf16.mxu0 0
          %616 = vmatpush1.bf16.msra.mxu0 0
          %617 = vmatprep.subr.bf16.mxu0 0
          %618 = vmatpush1.bf16.msra.mxu0 0
          %619 = vmatprep.subr.bf16.mxu0 0
          %620 = vmatpush1.bf16.msra.mxu0 0
          %621 = vmatprep.mubr.bf16.mxu0 0
          %622 = vmatmul.mubr.bf16.gmra.mrb[0].mxu0 %v509
          %v623 = vpop.f32.mrb[0].mxu0
          %v624 = vadd.f32 %v443, %v623
          %v625 = vpop.f32.mrb[0].mxu0
          %v626 = vpop.f32.mrb[0].mxu0
          %v627 = vadd.f32 %v443, %v626
          %v628 = vpop.f32.mrb[0].mxu0
          %629 = vmatprep.mubr.bf16.mxu0 0
          %630 = vmatmul.mubr.bf16.gmra.mrb[0].mxu0 %v510
          %v631 = vpop.f32.mrb[0].mxu0
          %v632 = vadd.f32 %v443, %v631
          %v633 = vpop.f32.mrb[0].mxu0
          %v634 = vpop.f32.mrb[0].mxu0
          %v635 = vadd.f32 %v443, %v634
          %v636 = vpop.f32.mrb[0].mxu0
          %637 = vmatprep.mubr.bf16.mxu0 0
          %638 = vmatmul.mubr.bf16.gmra.mrb[0].mxu0 %v511
          %v639 = vpop.f32.mrb[0].mxu0
          %v640 = vadd.f32 %v443, %v639
          %v641 = vpop.f32.mrb[0].mxu0
          %v642 = vpop.f32.mrb[0].mxu0
          %v643 = vadd.f32 %v443, %v642
          %v644 = vpop.f32.mrb[0].mxu0
          %645 = vmatprep.mubr.bf16.mxu0 0
          %646 = vmatmul.mubr.bf16.gmra.mrb[0].mxu0 %v512
          %v647 = vpop.f32.mrb[0].mxu0
          %v648 = vadd.f32 %v443, %v647
          %v649 = vpop.f32.mrb[0].mxu0
          %v650 = vpop.f32.mrb[0].mxu0
          %v651 = vadd.f32 %v443, %v650
          %v652 = vpop.f32.mrb[0].mxu0
          %653 = vmatprep.mubr.bf16.mxu0 0
          %654 = vmatmul.mubr.bf16.gmra.mrb[0].mxu0 %v513
          %v655 = vpop.f32.mrb[0].mxu0
          %v656 = vadd.f32 %v443, %v655
          %v657 = vpop.f32.mrb[0].mxu0
          %v658 = vpop.f32.mrb[0].mxu0
          %v659 = vadd.f32 %v443, %v658
          %v660 = vpop.f32.mrb[0].mxu0
          %661 = vmatprep.mubr.bf16.mxu0 0
          %662 = vmatmul.mubr.bf16.gmra.mrb[0].mxu0 %v514
          %v663 = vpop.f32.mrb[0].mxu0
          %v664 = vadd.f32 %v443, %v663
          %v665 = vpop.f32.mrb[0].mxu0
          %v666 = vpop.f32.mrb[0].mxu0
          %v667 = vadd.f32 %v443, %v666
          %v668 = vpop.f32.mrb[0].mxu0
          %669 = vmatprep.mubr.bf16.mxu0 0
          %670 = vmatmul.mubr.bf16.gmra.mrb[0].mxu0 %v515
          %v671 = vpop.f32.mrb[0].mxu0
          %v672 = vadd.f32 %v443, %v671
          %v673 = vpop.f32.mrb[0].mxu0
          %v674 = vpop.f32.mrb[0].mxu0
          %v675 = vadd.f32 %v443, %v674
          %v676 = vpop.f32.mrb[0].mxu0
          %677 = vmatprep.mubr.bf16.mxu0 0
          %678 = vmatmul.mubr.bf16.gmra.mrb[0].mxu0 %v516
          %v679 = vpop.f32.mrb[0].mxu0
          %v680 = vadd.f32 %v443, %v679
          %v681 = vpop.f32.mrb[0].mxu0
          %v682 = vpop.f32.mrb[0].mxu0
          %v683 = vadd.f32 %v443, %v682
          %v684 = vpop.f32.mrb[0].mxu0
          %685 = vmatprep.mubr.bf16.mxu0 0
          %686 = vmatmul.mubr.bf16.gmra.mrb[0].mxu0 %v517
          %v687 = vpop.f32.mrb[0].mxu0
          %v688 = vadd.f32 %v443, %v687
          %v689 = vpop.f32.mrb[0].mxu0
          %v690 = vpop.f32.mrb[0].mxu0
          %v691 = vadd.f32 %v443, %v690
          %v692 = vpop.f32.mrb[0].mxu0
          %693 = vmatprep.mubr.bf16.mxu0 0
          %694 = vmatmul.mubr.bf16.gmra.mrb[0].mxu0 %v518
          %v695 = vpop.f32.mrb[0].mxu0
          %v696 = vadd.f32 %v443, %v695
          %v697 = vpop.f32.mrb[0].mxu0
          %v698 = vpop.f32.mrb[0].mxu0
          %v699 = vadd.f32 %v443, %v698
          %v700 = vpop.f32.mrb[0].mxu0
          %701 = vmatprep.mubr.bf16.mxu0 0
          %702 = vmatmul.mubr.bf16.gmra.mrb[0].mxu0 %v519
          %v703 = vpop.f32.mrb[0].mxu0
          %v704 = vadd.f32 %v443, %v703
          %v705 = vpop.f32.mrb[0].mxu0
          %v706 = vpop.f32.mrb[0].mxu0
          %v707 = vadd.f32 %v443, %v706
          %v708 = vpop.f32.mrb[0].mxu0
          %709 = vmatprep.mubr.bf16.mxu0 0
          %710 = vmatmul.mubr.bf16.gmra.mrb[0].mxu0 %v520
          %v711 = vpop.f32.mrb[0].mxu0
          %v712 = vadd.f32 %v443, %v711
          %v713 = vpop.f32.mrb[0].mxu0
          %v714 = vpop.f32.mrb[0].mxu0
          %v715 = vadd.f32 %v443, %v714
          %v716 = vpop.f32.mrb[0].mxu0
          %717 = vmatprep.mubr.bf16.mxu0 0
          %718 = vmatmul.mubr.bf16.gmra.mrb[0].mxu0 %v521
          %v719 = vpop.f32.mrb[0].mxu0
          %v720 = vadd.f32 %v443, %v719
          %v721 = vpop.f32.mrb[0].mxu0
          %v722 = vpop.f32.mrb[0].mxu0
          %v723 = vadd.f32 %v443, %v722
          %v724 = vpop.f32.mrb[0].mxu0
          %725 = vmatprep.mubr.bf16.mxu0 0
          %726 = vmatmul.mubr.bf16.gmra.mrb[0].mxu0 %v522
          %v727 = vpop.f32.mrb[0].mxu0
          %v728 = vadd.f32 %v443, %v727
          %v729 = vpop.f32.mrb[0].mxu0
          %v730 = vpop.f32.mrb[0].mxu0
          %v731 = vadd.f32 %v443, %v730
          %v732 = vpop.f32.mrb[0].mxu0
          %733 = vmatprep.mubr.bf16.mxu0 0
          %734 = vmatmul.mubr.bf16.gmra.mrb[0].mxu0 %v523
          %v735 = vpop.f32.mrb[0].mxu0
          %v736 = vadd.f32 %v443, %v735
          %v737 = vpop.f32.mrb[0].mxu0
          %v738 = vpop.f32.mrb[0].mxu0
          %v739 = vadd.f32 %v443, %v738
          %v740 = vpop.f32.mrb[0].mxu0
          %741 = vmatprep.mubr.bf16.mxu0 0
          %742 = vmatmul.mubr.bf16.gmra.mrb[0].mxu0 %v524
          %v743 = vpop.f32.mrb[0].mxu0
          %v744 = vadd.f32 %v443, %v743
          %v745 = vpop.f32.mrb[0].mxu0
          %v746 = vpop.f32.mrb[0].mxu0
          %v747 = vadd.f32 %v443, %v746
          %v748 = vpop.f32.mrb[0].mxu0
          %749 = vdwg.mxu0
          %v750 = vpack.c.bf16 %v627, %v624
          %v751 = vpack.c.bf16 %v635, %v632
          %v752 = vpack.c.bf16 %v643, %v640
          %v753 = vpack.c.bf16 %v651, %v648
          %v754 = vpack.c.bf16 %v659, %v656
          %v755 = vpack.c.bf16 %v667, %v664
          %v756 = vpack.c.bf16 %v675, %v672
          %v757 = vpack.c.bf16 %v683, %v680
          %v758 = vpack.c.bf16 %v691, %v688
          %v759 = vpack.c.bf16 %v699, %v696
          %v760 = vpack.c.bf16 %v707, %v704
          %v761 = vpack.c.bf16 %v715, %v712
          %v762 = vpack.c.bf16 %v723, %v720
          %v763 = vpack.c.bf16 %v731, %v728
          %v764 = vpack.c.bf16 %v739, %v736
          %v765 = vpack.c.bf16 %v747, %v744
          %766 = vst [vmem:[#allocation2] sm:$0xff] %v750
          %767 = vst [vmem:[#allocation2 + $0x8] sm:$0xff] %v751
          %768 = vst [vmem:[#allocation2 + $0x10] sm:$0xff] %v752
          %769 = vst [vmem:[#allocation2 + $0x18] sm:$0xff] %v753
          %770 = vst [vmem:[#allocation2 + $0x20] sm:$0xff] %v754
          %771 = vst [vmem:[#allocation2 + $0x28] sm:$0xff] %v755
          %772 = vst [vmem:[#allocation2 + $0x30] sm:$0xff] %v756
          %773 = vst [vmem:[#allocation2 + $0x38] sm:$0xff] %v757
          %774 = vst [vmem:[#allocation2 + $0x40] sm:$0xff] %v758
          %775 = vst [vmem:[#allocation2 + $0x48] sm:$0xff] %v759
          %776 = vst [vmem:[#allocation2 + $0x50] sm:$0xff] %v760
          %777 = vst [vmem:[#allocation2 + $0x58] sm:$0xff] %v761
          %778 = vst [vmem:[#allocation2 + $0x60] sm:$0xff] %v762
          %779 = vst [vmem:[#allocation2 + $0x68] sm:$0xff] %v763
          %780 = vst [vmem:[#allocation2 + $0x70] sm:$0xff] %v764
          %781 = vst [vmem:[#allocation2 + $0x78] sm:$0xff] %v765
        $region72: #{tpu_custom_call.1} parent=51 // pred_fallthru
          _
        // Predicated region
        $region73: #{tpu_custom_call.1} parent=51 // pred_check
          %p782 = pneg %p384
        $region74: #{tpu_custom_call.1} parent=51 // pred_check_branch
          %784 = sbr.rel (%p782) target = $region76
        $region75: #{tpu_custom_call.1} parent=51 // pred_region
          %v785 = vld [vmem:[%s336] sm:$0xff]
          %v786 = vld [vmem:[%s336 + $0x8] sm:$0xff]
          %v787 = vld [vmem:[%s336 + $0x10] sm:$0xff]
          %v788 = vld [vmem:[%s336 + $0x18] sm:$0xff]
          %v789 = vld [vmem:[%s336 + $0x20] sm:$0xff]
          %v790 = vld [vmem:[%s336 + $0x28] sm:$0xff]
          %v791 = vld [vmem:[%s336 + $0x30] sm:$0xff]
          %v792 = vld [vmem:[%s336 + $0x38] sm:$0xff]
          %v793 = vld [vmem:[%s336 + $0x40] sm:$0xff]
          %v794 = vld [vmem:[%s336 + $0x48] sm:$0xff]
          %v795 = vld [vmem:[%s336 + $0x50] sm:$0xff]
          %v796 = vld [vmem:[%s336 + $0x58] sm:$0xff]
          %v797 = vld [vmem:[%s336 + $0x60] sm:$0xff]
          %v798 = vld [vmem:[%s336 + $0x68] sm:$0xff]
          %v799 = vld [vmem:[%s336 + $0x70] sm:$0xff]
          %v800 = vld [vmem:[%s336 + $0x78] sm:$0xff]
          %v801 = vld [vmem:[#allocation2] sm:$0xff]
          %v802 = vld [vmem:[#allocation2 + $0x8] sm:$0xff]
          %v803 = vld [vmem:[#allocation2 + $0x10] sm:$0xff]
          %v804 = vld [vmem:[#allocation2 + $0x18] sm:$0xff]
          %v805 = vld [vmem:[#allocation2 + $0x20] sm:$0xff]
          %v806 = vld [vmem:[#allocation2 + $0x28] sm:$0xff]
          %v807 = vld [vmem:[#allocation2 + $0x30] sm:$0xff]
          %v808 = vld [vmem:[#allocation2 + $0x38] sm:$0xff]
          %v809 = vld [vmem:[#allocation2 + $0x40] sm:$0xff]
          %v810 = vld [vmem:[#allocation2 + $0x48] sm:$0xff]
          %v811 = vld [vmem:[#allocation2 + $0x50] sm:$0xff]
          %v812 = vld [vmem:[#allocation2 + $0x58] sm:$0xff]
          %v813 = vld [vmem:[#allocation2 + $0x60] sm:$0xff]
          %v814 = vld [vmem:[#allocation2 + $0x68] sm:$0xff]
          %v815 = vld [vmem:[#allocation2 + $0x70] sm:$0xff]
          %v816 = vld [vmem:[#allocation2 + $0x78] sm:$0xff]
          %v817 = vld [vmem:[%s4] sm:$0x1]
          %v819 = vlaneseq
          %v820 = vshrl.u32 %v819, 7
          %v821 = vsub.s32 0, %v820
          %v822 = vrot.slane %v817, %v821
          %v840 = vunpack.c.l.b16 %v785
          %v841 = vunpack.c.h.b16 %v785
          %v842 = vunpack.c.l.b16 %v786
          %v843 = vunpack.c.h.b16 %v786
          %v844 = vunpack.c.l.b16 %v787
          %v845 = vunpack.c.h.b16 %v787
          %v846 = vunpack.c.l.b16 %v788
          %v847 = vunpack.c.h.b16 %v788
          %v848 = vunpack.c.l.b16 %v789
          %v849 = vunpack.c.h.b16 %v789
          %v850 = vunpack.c.l.b16 %v790
          %v851 = vunpack.c.h.b16 %v790
          %v852 = vunpack.c.l.b16 %v791
          %v853 = vunpack.c.h.b16 %v791
          %v854 = vunpack.c.l.b16 %v792
          %v855 = vunpack.c.h.b16 %v792
          %v856 = vunpack.c.l.b16 %v793
          %v857 = vunpack.c.h.b16 %v793
          %v858 = vunpack.c.l.b16 %v794
          %v859 = vunpack.c.h.b16 %v794
          %v860 = vunpack.c.l.b16 %v795
          %v861 = vunpack.c.h.b16 %v795
          %v862 = vunpack.c.l.b16 %v796
          %v863 = vunpack.c.h.b16 %v796
          %v864 = vunpack.c.l.b16 %v797
          %v865 = vunpack.c.h.b16 %v797
          %v866 = vunpack.c.l.b16 %v798
          %v867 = vunpack.c.h.b16 %v798
          %v868 = vunpack.c.l.b16 %v799
          %v869 = vunpack.c.h.b16 %v799
          %v870 = vunpack.c.l.b16 %v800
          %v871 = vunpack.c.h.b16 %v800
          %v872 = vpack.c.b16 %v842, %v840
          %v873 = vpack.c.b16 %v843, %v841
          %v874 = vpack.c.b16 %v846, %v844
          %v875 = vpack.c.b16 %v847, %v845
          %v876 = vpack.c.b16 %v850, %v848
          %v877 = vpack.c.b16 %v851, %v849
          %v878 = vpack.c.b16 %v854, %v852
          %v879 = vpack.c.b16 %v855, %v853
          %v880 = vpack.c.b16 %v858, %v856
          %v881 = vpack.c.b16 %v859, %v857
          %v882 = vpack.c.b16 %v862, %v860
          %v883 = vpack.c.b16 %v863, %v861
          %v884 = vpack.c.b16 %v866, %v864
          %v885 = vpack.c.b16 %v867, %v865
          %v886 = vpack.c.b16 %v870, %v868
          %v887 = vpack.c.b16 %v871, %v869
          %904 = vmatprep.subr.bf16.mxu0 0
          %905 = vmatpush1.bf16.msra.mxu0 %v801
          %906 = vmatprep.subr.bf16.mxu0 0
          %907 = vmatpush1.bf16.msra.mxu0 %v802
          %908 = vmatprep.subr.bf16.mxu0 0
          %909 = vmatpush1.bf16.msra.mxu0 %v803
          %910 = vmatprep.subr.bf16.mxu0 0
          %911 = vmatpush1.bf16.msra.mxu0 %v804
          %912 = vmatprep.subr.bf16.mxu0 0
          %913 = vmatpush1.bf16.msra.mxu0 %v805
          %914 = vmatprep.subr.bf16.mxu0 0
          %915 = vmatpush1.bf16.msra.mxu0 %v806
          %916 = vmatprep.subr.bf16.mxu0 0
          %917 = vmatpush1.bf16.msra.mxu0 %v807
          %918 = vmatprep.subr.bf16.mxu0 0
          %919 = vmatpush1.bf16.msra.mxu0 %v808
          %920 = vmatprep.subr.bf16.mxu0 0
          %921 = vmatpush1.bf16.msra.mxu0 %v809
          %922 = vmatprep.subr.bf16.mxu0 0
          %923 = vmatpush1.bf16.msra.mxu0 %v810
          %924 = vmatprep.subr.bf16.mxu0 0
          %925 = vmatpush1.bf16.msra.mxu0 %v811
          %926 = vmatprep.subr.bf16.mxu0 0
          %927 = vmatpush1.bf16.msra.mxu0 %v812
          %928 = vmatprep.subr.bf16.mxu0 0
          %929 = vmatpush1.bf16.msra.mxu0 %v813
          %930 = vmatprep.subr.bf16.mxu0 0
          %931 = vmatpush1.bf16.msra.mxu0 %v814
          %932 = vmatprep.subr.bf16.mxu0 0
          %933 = vmatpush1.bf16.msra.mxu0 %v815
          %934 = vmatprep.subr.bf16.mxu0 0
          %935 = vmatpush1.bf16.msra.mxu0 %v816
          %936 = vmatprep.mubr.bf16.mxu0 %v873
          %937 = vmatmul.mubr.bf16.gmra.mrb[0].mxu0 %v872
          %v938 = vpop.f32.mrb[0].mxu0
          %v939 = vadd.f32 %v822, %v938
          %v940 = vpop.f32.mrb[0].mxu0
          %v941 = vpop.f32.mrb[0].mxu0
          %v942 = vadd.f32 %v822, %v941
          %v943 = vpop.f32.mrb[0].mxu0
          %944 = vmatprep.mubr.bf16.mxu0 %v875
          %945 = vmatmul.mubr.bf16.gmra.mrb[0].mxu0 %v874
          %v946 = vpop.f32.mrb[0].mxu0
          %v947 = vadd.f32 %v822, %v946
          %v948 = vpop.f32.mrb[0].mxu0
          %v949 = vpop.f32.mrb[0].mxu0
          %v950 = vadd.f32 %v822, %v949
          %v951 = vpop.f32.mrb[0].mxu0
          %952 = vmatprep.mubr.bf16.mxu0 %v877
          %953 = vmatmul.mubr.bf16.gmra.mrb[0].mxu0 %v876
          %v954 = vpop.f32.mrb[0].mxu0
          %v955 = vadd.f32 %v822, %v954
          %v956 = vpop.f32.mrb[0].mxu0
          %v957 = vpop.f32.mrb[0].mxu0
          %v958 = vadd.f32 %v822, %v957
          %v959 = vpop.f32.mrb[0].mxu0
          %960 = vmatprep.mubr.bf16.mxu0 %v879
          %961 = vmatmul.mubr.bf16.gmra.mrb[0].mxu0 %v878
          %v962 = vpop.f32.mrb[0].mxu0
          %v963 = vadd.f32 %v822, %v962
          %v964 = vpop.f32.mrb[0].mxu0
          %v965 = vpop.f32.mrb[0].mxu0
          %v966 = vadd.f32 %v822, %v965
          %v967 = vpop.f32.mrb[0].mxu0
          %968 = vmatprep.mubr.bf16.mxu0 %v881
          %969 = vmatmul.mubr.bf16.gmra.mrb[0].mxu0 %v880
          %v970 = vpop.f32.mrb[0].mxu0
          %v971 = vadd.f32 %v822, %v970
          %v972 = vpop.f32.mrb[0].mxu0
          %v973 = vpop.f32.mrb[0].mxu0
          %v974 = vadd.f32 %v822, %v973
          %v975 = vpop.f32.mrb[0].mxu0
          %976 = vmatprep.mubr.bf16.mxu0 %v883
          %977 = vmatmul.mubr.bf16.gmra.mrb[0].mxu0 %v882
          %v978 = vpop.f32.mrb[0].mxu0
          %v979 = vadd.f32 %v822, %v978
          %v980 = vpop.f32.mrb[0].mxu0
          %v981 = vpop.f32.mrb[0].mxu0
          %v982 = vadd.f32 %v822, %v981
          %v983 = vpop.f32.mrb[0].mxu0
          %984 = vmatprep.mubr.bf16.mxu0 %v885
          %985 = vmatmul.mubr.bf16.gmra.mrb[0].mxu0 %v884
          %v986 = vpop.f32.mrb[0].mxu0
          %v987 = vadd.f32 %v822, %v986
          %v988 = vpop.f32.mrb[0].mxu0
          %v989 = vpop.f32.mrb[0].mxu0
          %v990 = vadd.f32 %v822, %v989
          %v991 = vpop.f32.mrb[0].mxu0
          %992 = vmatprep.mubr.bf16.mxu0 %v887
          %993 = vmatmul.mubr.bf16.gmra.mrb[0].mxu0 %v886
          %v994 = vpop.f32.mrb[0].mxu0
          %v995 = vadd.f32 %v822, %v994
          %v996 = vpop.f32.mrb[0].mxu0
          %v997 = vpop.f32.mrb[0].mxu0
          %v998 = vadd.f32 %v822, %v997
          %v999 = vpop.f32.mrb[0].mxu0
          %1000 = vdwg.mxu0
          %v1001 = vmax.f32 %v939, 0.0
          %v1002 = vmax.f32 %v942, 0.0
          %v1003 = vmax.f32 %v947, 0.0
          %v1004 = vmax.f32 %v950, 0.0
          %v1005 = vmax.f32 %v955, 0.0
          %v1006 = vmax.f32 %v958, 0.0
          %v1007 = vmax.f32 %v963, 0.0
          %v1008 = vmax.f32 %v966, 0.0
          %v1009 = vmax.f32 %v971, 0.0
          %v1010 = vmax.f32 %v974, 0.0
          %v1011 = vmax.f32 %v979, 0.0
          %v1012 = vmax.f32 %v982, 0.0
          %v1013 = vmax.f32 %v987, 0.0
          %v1014 = vmax.f32 %v990, 0.0
          %v1015 = vmax.f32 %v995, 0.0
          %v1016 = vmax.f32 %v998, 0.0
          %v1017 = vpack.c.bf16 %v1002, %v1001
          %v1018 = vpack.c.bf16 %v1004, %v1003
          %v1019 = vpack.c.bf16 %v1006, %v1005
          %v1020 = vpack.c.bf16 %v1008, %v1007
          %v1021 = vpack.c.bf16 %v1010, %v1009
          %v1022 = vpack.c.bf16 %v1012, %v1011
          %v1023 = vpack.c.bf16 %v1014, %v1013
          %v1024 = vpack.c.bf16 %v1016, %v1015
          %v1025 = vld [vmem:[#allocation10] sm:$0xf]
          %v1026 = vld [vmem:[#allocation10 + $0x4] sm:$0xf]
          %v1027 = vld [vmem:[#allocation10 + $0x8] sm:$0xf]
          %v1028 = vld [vmem:[#allocation10 + $0xc] sm:$0xf]
          %v1029 = vld [vmem:[#allocation10 + $0x10] sm:$0xf]
          %v1030 = vld [vmem:[#allocation10 + $0x14] sm:$0xf]
          %v1031 = vld [vmem:[#allocation10 + $0x18] sm:$0xf]
          %v1032 = vld [vmem:[#allocation10 + $0x1c] sm:$0xf]
          %v1033 = vld [vmem:[#allocation10 + $0x20] sm:$0xf]
          %v1034 = vld [vmem:[#allocation10 + $0x24] sm:$0xf]
          %v1035 = vld [vmem:[#allocation10 + $0x28] sm:$0xf]
          %v1036 = vld [vmem:[#allocation10 + $0x2c] sm:$0xf]
          %v1037 = vld [vmem:[#allocation10 + $0x30] sm:$0xf]
          %v1038 = vld [vmem:[#allocation10 + $0x34] sm:$0xf]
          %v1039 = vld [vmem:[#allocation10 + $0x38] sm:$0xf]
          %v1040 = vld [vmem:[#allocation10 + $0x3c] sm:$0xf]
          %v1041 = vld [vmem:[%s6] sm:$0x1]
          %v1043 = vlaneseq
          %v1044 = vshrl.u32 %v1043, 7
          %v1045 = vsub.s32 0, %v1044
          %v1046 = vrot.slane %v1041, %v1045
          %v1064 = vunpack.c.l.b16 %v1025
          %v1065 = vunpack.c.l.b16 %v1026
          %v1066 = vunpack.c.l.b16 %v1027
          %v1067 = vunpack.c.l.b16 %v1028
          %v1068 = vunpack.c.l.b16 %v1029
          %v1069 = vunpack.c.l.b16 %v1030
          %v1070 = vunpack.c.l.b16 %v1031
          %v1071 = vunpack.c.l.b16 %v1032
          %v1072 = vunpack.c.l.b16 %v1033
          %v1073 = vunpack.c.l.b16 %v1034
          %v1074 = vunpack.c.l.b16 %v1035
          %v1075 = vunpack.c.l.b16 %v1036
          %v1076 = vunpack.c.l.b16 %v1037
          %v1077 = vunpack.c.l.b16 %v1038
          %v1078 = vunpack.c.l.b16 %v1039
          %v1079 = vunpack.c.l.b16 %v1040
          %v1080 = vpack.c.b16 %v1065, %v1064
          %v1081 = vpack.c.b16 %v1067, %v1066
          %v1082 = vpack.c.b16 %v1069, %v1068
          %v1083 = vpack.c.b16 %v1071, %v1070
          %v1084 = vpack.c.b16 %v1073, %v1072
          %v1085 = vpack.c.b16 %v1075, %v1074
          %v1086 = vpack.c.b16 %v1077, %v1076
          %v1087 = vpack.c.b16 %v1079, %v1078
          %1096 = vmatprep.subr.bf16.mxu0 0
          %1097 = vmatpush1.bf16.msra.mxu0 %v1080
          %1098 = vmatprep.subr.bf16.mxu0 0
          %1099 = vmatpush1.bf16.msra.mxu0 %v1081
          %1100 = vmatprep.subr.bf16.mxu0 0
          %1101 = vmatpush1.bf16.msra.mxu0 %v1082
          %1102 = vmatprep.subr.bf16.mxu0 0
          %1103 = vmatpush1.bf16.msra.mxu0 %v1083
          %1104 = vmatprep.subr.bf16.mxu0 0
          %1105 = vmatpush1.bf16.msra.mxu0 %v1084
          %1106 = vmatprep.subr.bf16.mxu0 0
          %1107 = vmatpush1.bf16.msra.mxu0 %v1085
          %1108 = vmatprep.subr.bf16.mxu0 0
          %1109 = vmatpush1.bf16.msra.mxu0 %v1086
          %1110 = vmatprep.subr.bf16.mxu0 0
          %1111 = vmatpush1.bf16.msra.mxu0 %v1087
          %1112 = vmatprep.subr.bf16.mxu0 0
          %1113 = vmatpush1.bf16.msra.mxu0 0
          %1114 = vmatprep.subr.bf16.mxu0 0
          %1115 = vmatpush1.bf16.msra.mxu0 0
          %1116 = vmatprep.subr.bf16.mxu0 0
          %1117 = vmatpush1.bf16.msra.mxu0 0
          %1118 = vmatprep.subr.bf16.mxu0 0
          %1119 = vmatpush1.bf16.msra.mxu0 0
          %1120 = vmatprep.subr.bf16.mxu0 0
          %1121 = vmatpush1.bf16.msra.mxu0 0
          %1122 = vmatprep.subr.bf16.mxu0 0
          %1123 = vmatpush1.bf16.msra.mxu0 0
          %1124 = vmatprep.subr.bf16.mxu0 0
          %1125 = vmatpush1.bf16.msra.mxu0 0
          %1126 = vmatprep.subr.bf16.mxu0 0
          %1127 = vmatpush1.bf16.msra.mxu0 0
          %1128 = vmatprep.mubr.bf16.mxu0 0
          %1129 = vmatmul.mubr.bf16.gmra.mrb[0].mxu0 %v1017
          %v1130 = vpop.f32.mrb[0].mxu0
          %v1131 = vadd.f32 %v1046, %v1130
          %v1132 = vpop.f32.mrb[0].mxu0
          %v1133 = vpop.f32.mrb[0].mxu0
          %v1134 = vadd.f32 %v1046, %v1133
          %v1135 = vpop.f32.mrb[0].mxu0
          %1136 = vmatprep.mubr.bf16.mxu0 0
          %1137 = vmatmul.mubr.bf16.gmra.mrb[0].mxu0 %v1018
          %v1138 = vpop.f32.mrb[0].mxu0
          %v1139 = vadd.f32 %v1046, %v1138
          %v1140 = vpop.f32.mrb[0].mxu0
          %v1141 = vpop.f32.mrb[0].mxu0
          %v1142 = vadd.f32 %v1046, %v1141
          %v1143 = vpop.f32.mrb[0].mxu0
          %1144 = vmatprep.mubr.bf16.mxu0 0
          %1145 = vmatmul.mubr.bf16.gmra.mrb[0].mxu0 %v1019
          %v1146 = vpop.f32.mrb[0].mxu0
          %v1147 = vadd.f32 %v1046, %v1146
          %v1148 = vpop.f32.mrb[0].mxu0
          %v1149 = vpop.f32.mrb[0].mxu0
          %v1150 = vadd.f32 %v1046, %v1149
          %v1151 = vpop.f32.mrb[0].mxu0
          %1152 = vmatprep.mubr.bf16.mxu0 0
          %1153 = vmatmul.mubr.bf16.gmra.mrb[0].mxu0 %v1020
          %v1154 = vpop.f32.mrb[0].mxu0
          %v1155 = vadd.f32 %v1046, %v1154
          %v1156 = vpop.f32.mrb[0].mxu0
          %v1157 = vpop.f32.mrb[0].mxu0
          %v1158 = vadd.f32 %v1046, %v1157
          %v1159 = vpop.f32.mrb[0].mxu0
          %1160 = vmatprep.mubr.bf16.mxu0 0
          %1161 = vmatmul.mubr.bf16.gmra.mrb[0].mxu0 %v1021
          %v1162 = vpop.f32.mrb[0].mxu0
          %v1163 = vadd.f32 %v1046, %v1162
          %v1164 = vpop.f32.mrb[0].mxu0
          %v1165 = vpop.f32.mrb[0].mxu0
          %v1166 = vadd.f32 %v1046, %v1165
          %v1167 = vpop.f32.mrb[0].mxu0
          %1168 = vmatprep.mubr.bf16.mxu0 0
          %1169 = vmatmul.mubr.bf16.gmra.mrb[0].mxu0 %v1022
          %v1170 = vpop.f32.mrb[0].mxu0
          %v1171 = vadd.f32 %v1046, %v1170
          %v1172 = vpop.f32.mrb[0].mxu0
          %v1173 = vpop.f32.mrb[0].mxu0
          %v1174 = vadd.f32 %v1046, %v1173
          %v1175 = vpop.f32.mrb[0].mxu0
          %1176 = vmatprep.mubr.bf16.mxu0 0
          %1177 = vmatmul.mubr.bf16.gmra.mrb[0].mxu0 %v1023
          %v1178 = vpop.f32.mrb[0].mxu0
          %v1179 = vadd.f32 %v1046, %v1178
          %v1180 = vpop.f32.mrb[0].mxu0
          %v1181 = vpop.f32.mrb[0].mxu0
          %v1182 = vadd.f32 %v1046, %v1181
          %v1183 = vpop.f32.mrb[0].mxu0
          %1184 = vmatprep.mubr.bf16.mxu0 0
          %1185 = vmatmul.mubr.bf16.gmra.mrb[0].mxu0 %v1024
          %v1186 = vpop.f32.mrb[0].mxu0
          %v1187 = vadd.f32 %v1046, %v1186
          %v1188 = vpop.f32.mrb[0].mxu0
          %v1189 = vpop.f32.mrb[0].mxu0
          %v1190 = vadd.f32 %v1046, %v1189
          %v1191 = vpop.f32.mrb[0].mxu0
          %1192 = vdwg.mxu0
          %s1193 = smul.u32 %s32, 128
          %v1194 = vpack.c.bf16 %v1134, %v1131
          %v1195 = vpack.c.bf16 %v1142, %v1139
          %v1196 = vpack.c.bf16 %v1150, %v1147
          %v1197 = vpack.c.bf16 %v1158, %v1155
          %v1198 = vpack.c.bf16 %v1166, %v1163
          %v1199 = vpack.c.bf16 %v1174, %v1171
          %v1200 = vpack.c.bf16 %v1182, %v1179
          %v1201 = vpack.c.bf16 %v1190, %v1187
          %s1202 = sshra.s32 %s1193, 4
          %s1203 = sand.u32 %s1193, 15
          %s1204 = smul.addr %s1202, 8
          %s1205 = scalar_lea.vmem [#allocation3], %s1204
          %1206 = vst [vmem:[%s1205] sm:$0xff] %v1194
          %1207 = vst [vmem:[%s1205 + $0x8] sm:$0xff] %v1195
          %1208 = vst [vmem:[%s1205 + $0x10] sm:$0xff] %v1196
          %1209 = vst [vmem:[%s1205 + $0x18] sm:$0xff] %v1197
          %1210 = vst [vmem:[%s1205 + $0x20] sm:$0xff] %v1198
          %1211 = vst [vmem:[%s1205 + $0x28] sm:$0xff] %v1199
          %1212 = vst [vmem:[%s1205 + $0x30] sm:$0xff] %v1200
          %1213 = vst [vmem:[%s1205 + $0x38] sm:$0xff] %v1201
          %1214 = vst [vmem:[%s380] sm:$0xff] 0.0
          %1215 = vst [vmem:[%s380 + $0x8] sm:$0xff] 0.0
          %1216 = vst [vmem:[%s380 + $0x10] sm:$0xff] 0.0
          %1217 = vst [vmem:[%s380 + $0x18] sm:$0xff] 0.0
          %1218 = vst [vmem:[%s380 + $0x20] sm:$0xff] 0.0
          %1219 = vst [vmem:[%s380 + $0x28] sm:$0xff] 0.0
          %1220 = vst [vmem:[%s380 + $0x30] sm:$0xff] 0.0
          %1221 = vst [vmem:[%s380 + $0x38] sm:$0xff] 0.0
          %1222 = vst [vmem:[%s380 + $0x40] sm:$0xff] 0.0
          %1223 = vst [vmem:[%s380 + $0x48] sm:$0xff] 0.0
          %1224 = vst [vmem:[%s380 + $0x50] sm:$0xff] 0.0
          %1225 = vst [vmem:[%s380 + $0x58] sm:$0xff] 0.0
          %1226 = vst [vmem:[%s380 + $0x60] sm:$0xff] 0.0
          %1227 = vst [vmem:[%s380 + $0x68] sm:$0xff] 0.0
          %1228 = vst [vmem:[%s380 + $0x70] sm:$0xff] 0.0
          %1229 = vst [vmem:[%s380 + $0x78] sm:$0xff] 0.0
        $region76: #{tpu_custom_call.1} parent=51 // pred_fallthru
          _
        %p1230 = scmp.eq.s32.totalorder %s31, 1
        // Predicated region
        $region77: #{tpu_custom_call.1} parent=51 // pred_check
          %p1231 = pneg %p1230
        $region78: #{tpu_custom_call.1} parent=51 // pred_check_branch
          %1233 = sbr.rel (%p1231) target = $region80
        $region79: #{tpu_custom_call.1} parent=51 // pred_region
          %v1234 = vld [vmem:[%s336] sm:$0xff]
          %v1235 = vld [vmem:[%s336 + $0x8] sm:$0xff]
          %v1236 = vld [vmem:[%s336 + $0x10] sm:$0xff]
          %v1237 = vld [vmem:[%s336 + $0x18] sm:$0xff]
          %v1238 = vld [vmem:[%s336 + $0x20] sm:$0xff]
          %v1239 = vld [vmem:[%s336 + $0x28] sm:$0xff]
          %v1240 = vld [vmem:[%s336 + $0x30] sm:$0xff]
          %v1241 = vld [vmem:[%s336 + $0x38] sm:$0xff]
          %v1242 = vld [vmem:[%s336 + $0x40] sm:$0xff]
          %v1243 = vld [vmem:[%s336 + $0x48] sm:$0xff]
          %v1244 = vld [vmem:[%s336 + $0x50] sm:$0xff]
          %v1245 = vld [vmem:[%s336 + $0x58] sm:$0xff]
          %v1246 = vld [vmem:[%s336 + $0x60] sm:$0xff]
          %v1247 = vld [vmem:[%s336 + $0x68] sm:$0xff]
          %v1248 = vld [vmem:[%s336 + $0x70] sm:$0xff]
          %v1249 = vld [vmem:[%s336 + $0x78] sm:$0xff]
          %v1250 = vld [vmem:[#allocation3] sm:$0xff]
          %v1251 = vld [vmem:[#allocation3 + $0x8] sm:$0xff]
          %v1252 = vld [vmem:[#allocation3 + $0x10] sm:$0xff]
          %v1253 = vld [vmem:[#allocation3 + $0x18] sm:$0xff]
          %v1254 = vld [vmem:[#allocation3 + $0x20] sm:$0xff]
          %v1255 = vld [vmem:[#allocation3 + $0x28] sm:$0xff]
          %v1256 = vld [vmem:[#allocation3 + $0x30] sm:$0xff]
          %v1257 = vld [vmem:[#allocation3 + $0x38] sm:$0xff]
          %v1258 = vld [vmem:[#allocation3 + $0x40] sm:$0xff]
          %v1259 = vld [vmem:[#allocation3 + $0x48] sm:$0xff]
          %v1260 = vld [vmem:[#allocation3 + $0x50] sm:$0xff]
          %v1261 = vld [vmem:[#allocation3 + $0x58] sm:$0xff]
          %v1262 = vld [vmem:[#allocation3 + $0x60] sm:$0xff]
          %v1263 = vld [vmem:[#allocation3 + $0x68] sm:$0xff]
          %v1264 = vld [vmem:[#allocation3 + $0x70] sm:$0xff]
          %v1265 = vld [vmem:[#allocation3 + $0x78] sm:$0xff]
          %v1266 = vld [vmem:[%s7] sm:$0x1]
          %v1268 = vlaneseq
          %v1269 = vshrl.u32 %v1268, 7
          %v1270 = vsub.s32 0, %v1269
          %v1271 = vrot.slane %v1266, %v1270
          %v1289 = vunpack.c.l.b16 %v1234
          %v1290 = vunpack.c.h.b16 %v1234
          %v1291 = vunpack.c.l.b16 %v1235
          %v1292 = vunpack.c.h.b16 %v1235
          %v1293 = vunpack.c.l.b16 %v1236
          %v1294 = vunpack.c.h.b16 %v1236
          %v1295 = vunpack.c.l.b16 %v1237
          %v1296 = vunpack.c.h.b16 %v1237
          %v1297 = vunpack.c.l.b16 %v1238
          %v1298 = vunpack.c.h.b16 %v1238
          %v1299 = vunpack.c.l.b16 %v1239
          %v1300 = vunpack.c.h.b16 %v1239
          %v1301 = vunpack.c.l.b16 %v1240
          %v1302 = vunpack.c.h.b16 %v1240
          %v1303 = vunpack.c.l.b16 %v1241
          %v1304 = vunpack.c.h.b16 %v1241
          %v1305 = vunpack.c.l.b16 %v1242
          %v1306 = vunpack.c.h.b16 %v1242
          %v1307 = vunpack.c.l.b16 %v1243
          %v1308 = vunpack.c.h.b16 %v1243
          %v1309 = vunpack.c.l.b16 %v1244
          %v1310 = vunpack.c.h.b16 %v1244
          %v1311 = vunpack.c.l.b16 %v1245
          %v1312 = vunpack.c.h.b16 %v1245
          %v1313 = vunpack.c.l.b16 %v1246
          %v1314 = vunpack.c.h.b16 %v1246
          %v1315 = vunpack.c.l.b16 %v1247
          %v1316 = vunpack.c.h.b16 %v1247
          %v1317 = vunpack.c.l.b16 %v1248
          %v1318 = vunpack.c.h.b16 %v1248
          %v1319 = vunpack.c.l.b16 %v1249
          %v1320 = vunpack.c.h.b16 %v1249
          %v1321 = vpack.c.b16 %v1291, %v1289
          %v1322 = vpack.c.b16 %v1292, %v1290
          %v1323 = vpack.c.b16 %v1295, %v1293
          %v1324 = vpack.c.b16 %v1296, %v1294
          %v1325 = vpack.c.b16 %v1299, %v1297
          %v1326 = vpack.c.b16 %v1300, %v1298
          %v1327 = vpack.c.b16 %v1303, %v1301
          %v1328 = vpack.c.b16 %v1304, %v1302
          %v1329 = vpack.c.b16 %v1307, %v1305
          %v1330 = vpack.c.b16 %v1308, %v1306
          %v1331 = vpack.c.b16 %v1311, %v1309
          %v1332 = vpack.c.b16 %v1312, %v1310
          %v1333 = vpack.c.b16 %v1315, %v1313
          %v1334 = vpack.c.b16 %v1316, %v1314
          %v1335 = vpack.c.b16 %v1319, %v1317
          %v1336 = vpack.c.b16 %v1320, %v1318
          %1353 = vmatprep.subr.bf16.mxu0 0
          %1354 = vmatpush1.bf16.msra.mxu0 %v1250
          %1355 = vmatprep.subr.bf16.mxu0 0
          %1356 = vmatpush1.bf16.msra.mxu0 %v1251
          %1357 = vmatprep.subr.bf16.mxu0 0
          %1358 = vmatpush1.bf16.msra.mxu0 %v1252
          %1359 = vmatprep.subr.bf16.mxu0 0
          %1360 = vmatpush1.bf16.msra.mxu0 %v1253
          %1361 = vmatprep.subr.bf16.mxu0 0
          %1362 = vmatpush1.bf16.msra.mxu0 %v1254
          %1363 = vmatprep.subr.bf16.mxu0 0
          %1364 = vmatpush1.bf16.msra.mxu0 %v1255
          %1365 = vmatprep.subr.bf16.mxu0 0
          %1366 = vmatpush1.bf16.msra.mxu0 %v1256
          %1367 = vmatprep.subr.bf16.mxu0 0
          %1368 = vmatpush1.bf16.msra.mxu0 %v1257
          %1369 = vmatprep.subr.bf16.mxu0 0
          %1370 = vmatpush1.bf16.msra.mxu0 %v1258
          %1371 = vmatprep.subr.bf16.mxu0 0
          %1372 = vmatpush1.bf16.msra.mxu0 %v1259
          %1373 = vmatprep.subr.bf16.mxu0 0
          %1374 = vmatpush1.bf16.msra.mxu0 %v1260
          %1375 = vmatprep.subr.bf16.mxu0 0
          %1376 = vmatpush1.bf16.msra.mxu0 %v1261
          %1377 = vmatprep.subr.bf16.mxu0 0
          %1378 = vmatpush1.bf16.msra.mxu0 %v1262
          %1379 = vmatprep.subr.bf16.mxu0 0
          %1380 = vmatpush1.bf16.msra.mxu0 %v1263
          %1381 = vmatprep.subr.bf16.mxu0 0
          %1382 = vmatpush1.bf16.msra.mxu0 %v1264
          %1383 = vmatprep.subr.bf16.mxu0 0
          %1384 = vmatpush1.bf16.msra.mxu0 %v1265
          %1385 = vmatprep.mubr.bf16.mxu0 %v1322
          %1386 = vmatmul.mubr.bf16.gmra.mrb[0].mxu0 %v1321
          %v1387 = vpop.f32.mrb[0].mxu0
          %v1388 = vadd.f32 %v1271, %v1387
          %v1389 = vpop.f32.mrb[0].mxu0
          %v1390 = vpop.f32.mrb[0].mxu0
          %v1391 = vadd.f32 %v1271, %v1390
          %v1392 = vpop.f32.mrb[0].mxu0
          %1393 = vmatprep.mubr.bf16.mxu0 %v1324
          %1394 = vmatmul.mubr.bf16.gmra.mrb[0].mxu0 %v1323
          %v1395 = vpop.f32.mrb[0].mxu0
          %v1396 = vadd.f32 %v1271, %v1395
          %v1397 = vpop.f32.mrb[0].mxu0
          %v1398 = vpop.f32.mrb[0].mxu0
          %v1399 = vadd.f32 %v1271, %v1398
          %v1400 = vpop.f32.mrb[0].mxu0
          %1401 = vmatprep.mubr.bf16.mxu0 %v1326
          %1402 = vmatmul.mubr.bf16.gmra.mrb[0].mxu0 %v1325
          %v1403 = vpop.f32.mrb[0].mxu0
          %v1404 = vadd.f32 %v1271, %v1403
          %v1405 = vpop.f32.mrb[0].mxu0
          %v1406 = vpop.f32.mrb[0].mxu0
          %v1407 = vadd.f32 %v1271, %v1406
          %v1408 = vpop.f32.mrb[0].mxu0
          %1409 = vmatprep.mubr.bf16.mxu0 %v1328
          %1410 = vmatmul.mubr.bf16.gmra.mrb[0].mxu0 %v1327
          %v1411 = vpop.f32.mrb[0].mxu0
          %v1412 = vadd.f32 %v1271, %v1411
          %v1413 = vpop.f32.mrb[0].mxu0
          %v1414 = vpop.f32.mrb[0].mxu0
          %v1415 = vadd.f32 %v1271, %v1414
          %v1416 = vpop.f32.mrb[0].mxu0
          %1417 = vmatprep.mubr.bf16.mxu0 %v1330
          %1418 = vmatmul.mubr.bf16.gmra.mrb[0].mxu0 %v1329
          %v1419 = vpop.f32.mrb[0].mxu0
          %v1420 = vadd.f32 %v1271, %v1419
          %v1421 = vpop.f32.mrb[0].mxu0
          %v1422 = vpop.f32.mrb[0].mxu0
          %v1423 = vadd.f32 %v1271, %v1422
          %v1424 = vpop.f32.mrb[0].mxu0
          %1425 = vmatprep.mubr.bf16.mxu0 %v1332
          %1426 = vmatmul.mubr.bf16.gmra.mrb[0].mxu0 %v1331
          %v1427 = vpop.f32.mrb[0].mxu0
          %v1428 = vadd.f32 %v1271, %v1427
          %v1429 = vpop.f32.mrb[0].mxu0
          %v1430 = vpop.f32.mrb[0].mxu0
          %v1431 = vadd.f32 %v1271, %v1430
          %v1432 = vpop.f32.mrb[0].mxu0
          %1433 = vmatprep.mubr.bf16.mxu0 %v1334
          %1434 = vmatmul.mubr.bf16.gmra.mrb[0].mxu0 %v1333
          %v1435 = vpop.f32.mrb[0].mxu0
          %v1436 = vadd.f32 %v1271, %v1435
          %v1437 = vpop.f32.mrb[0].mxu0
          %v1438 = vpop.f32.mrb[0].mxu0
          %v1439 = vadd.f32 %v1271, %v1438
          %v1440 = vpop.f32.mrb[0].mxu0
          %1441 = vmatprep.mubr.bf16.mxu0 %v1336
          %1442 = vmatmul.mubr.bf16.gmra.mrb[0].mxu0 %v1335
          %v1443 = vpop.f32.mrb[0].mxu0
          %v1444 = vadd.f32 %v1271, %v1443
          %v1445 = vpop.f32.mrb[0].mxu0
          %v1446 = vpop.f32.mrb[0].mxu0
          %v1447 = vadd.f32 %v1271, %v1446
          %v1448 = vpop.f32.mrb[0].mxu0
          %1449 = vdwg.mxu0
          %1450 = vst [vmem:[%s380] sm:$0xff] %v1388
          %1451 = vst [vmem:[%s380 + $0x8] sm:$0xff] %v1391
          %1452 = vst [vmem:[%s380 + $0x10] sm:$0xff] %v1396
          %1453 = vst [vmem:[%s380 + $0x18] sm:$0xff] %v1399
          %1454 = vst [vmem:[%s380 + $0x20] sm:$0xff] %v1404
          %1455 = vst [vmem:[%s380 + $0x28] sm:$0xff] %v1407
          %1456 = vst [vmem:[%s380 + $0x30] sm:$0xff] %v1412
          %1457 = vst [vmem:[%s380 + $0x38] sm:$0xff] %v1415
          %1458 = vst [vmem:[%s380 + $0x40] sm:$0xff] %v1420
          %1459 = vst [vmem:[%s380 + $0x48] sm:$0xff] %v1423
          %1460 = vst [vmem:[%s380 + $0x50] sm:$0xff] %v1428
          %1461 = vst [vmem:[%s380 + $0x58] sm:$0xff] %v1431
          %1462 = vst [vmem:[%s380 + $0x60] sm:$0xff] %v1436
          %1463 = vst [vmem:[%s380 + $0x68] sm:$0xff] %v1439
          %1464 = vst [vmem:[%s380 + $0x70] sm:$0xff] %v1444
          %1465 = vst [vmem:[%s380 + $0x78] sm:$0xff] %v1447
        $region80: #{tpu_custom_call.1} parent=51 // pred_fallthru
          _
        %s1466 = sand.u32 %s220, 1
        %s1467 = scalar_lea.sflag [#allocation6], %s1466
        %s1468 = sand.u32 %s220, 1
        %s1469 = smul.addr %s1468, 128
        %s1470 = scalar_lea.vmem [#allocation12], %s1469
        // Predicated region
        $region81: #{tpu_custom_call.1} parent=51 // pred_check
          %p1471 = pneg %p230
        $region82: #{tpu_custom_call.1} parent=51 // pred_check_branch
          %1473 = sbr.rel (%p1471) target = $region84
        $region83: #{tpu_custom_call.1} parent=51 // pred_region
          %s1474 = smul.u32 16, %s32
          %s1476 = ssub.s32 2048, 2048
          %1477 = vsyncadd %s1467, %s1476
          %s1478 = smul.addr %s1474, 128
          %s1479 = scalar_lea.hbm %s8, %s1478
          %s1480 = sshll.u32 %s1470, 4
          %s1481 = int_to_ptr.vmem [resolvable:$true] %s1480
          %1486 = dma.vmem_to_hbm [thread:$0]  %s1481, 2048, %s1479, %s1467, 128, 128, 8
        $region84: #{tpu_custom_call.1} parent=51 // pred_fallthru
          _
      $region52: #{tpu_custom_call.1} parent=5 // pred_fallthru
        _
      %p1487 = scmp.le.s32.totalorder 2, %s22
      // Predicated region
      $region85: #{tpu_custom_call.1} parent=5 // pred_check
        %p1488 = pneg %p1487
      $region86: #{tpu_custom_call.1} parent=5 // pred_check_branch
        %1490 = sbr.rel (%p1488) target = $region88
      $region87: #{tpu_custom_call.1} parent=5 // pred_region
        %s1491 = ssub.s32 %s22, 2
        // Predicated region
        $region89: #{tpu_custom_call.1} parent=87 // pred_check
          %p1492 = pneg %p236
        $region90: #{tpu_custom_call.1} parent=87 // pred_check_branch
          %1494 = sbr.rel (%p1492) target = $region92
        $region91: #{tpu_custom_call.1} parent=87 // pred_region
          %s1495 = sand.u32 %s221, 1
          %s1496 = scalar_lea.sflag [#allocation6], %s1495
          %s1497 = sand.u32 %s221, 1
          %s1498 = smul.addr %s1497, 128
          %s1499 = scalar_lea.vmem [#allocation12], %s1498
          %1500 = dma.done %s1496, 2048
        $region92: #{tpu_custom_call.1} parent=87 // pred_fallthru
          _
      $region88: #{tpu_custom_call.1} parent=5 // pred_fallthru
        _
    $region6: #{tpu_custom_call.1} parent=1 // loop_footer
      %s26 = sadd.s32 1, %s22
    $region7: #{tpu_custom_call.1} parent=1 // loop_footer_branch
      %21 = sbr.rel target = $region3
    $region8: #{tpu_custom_call.1} parent=1 // loop_exit
      _
    %1501 = vsyncpa [#allocation5], 1
    %s1502 = scalar_lea.sflag [#allocation5], 1
    %1503 = vsyncpa %s1502, 1
    %1504 = vsyncpa [#allocation8], 1
    %1505 = vsyncpa [#allocation11], 1
    %1506 = vsyncpa [#allocation6], 1
    %s1507 = scalar_lea.sflag [#allocation6], 1
    %1508 = vsyncpa %s1507, 1

</llo_original>
